<compile_context>
chip_gen: v6e
topology: v6e:2x2x1
jax: 0.10.0
libtpu: 0.0.40
codegen_flags: <defaults>
</compile_context>

<pallas_src>
import jax
import jax.numpy as jnp
from jax.experimental import pallas as pl
from jax.experimental.pallas import tpu as pltpu


# -----------------------------------------------------------------------------
# Weight-side lowering: conv / conv-transpose -> dense flat-in/flat-out matrices,
# and max-pool folded into the preceding conv as per-corner column selections.
# (Pure parameter transforms, traced once under jit; no activation work here.)
# -----------------------------------------------------------------------------

def conv_toeplitz(w, hin, win, stride, padding):
    """Dense T s.t. flat(conv2d(x, w, stride, padding)) = flat(x) @ T.

    w: (Cout, Cin, kh, kw) (PyTorch Conv2d layout, cross-correlation).
    flat layout is row-major over (channel, row, col).
    Returns (T, OH, OW) with T of shape (Cin*hin*win, Cout*OH*OW).
    """
    cout, cin, kh, kw = w.shape
    oh = (hin + 2 * padding - kh) // stride + 1
    ow = (win + 2 * padding - kw) // stride + 1
    iy = jnp.arange(hin)
    ix = jnp.arange(win)
    oy = jnp.arange(oh)
    ox = jnp.arange(ow)
    t = jnp.zeros((cin, hin, win, cout, oh, ow), jnp.float32)
    for ky in range(kh):
        for kx in range(kw):
            my = (iy[:, None] == oy[None, :] * stride + ky - padding).astype(jnp.float32)
            mx = (ix[:, None] == ox[None, :] * stride + kx - padding).astype(jnp.float32)
            wk = w[:, :, ky, kx].T                                   # (Cin, Cout)
            t = t + (wk[:, None, None, :, None, None]
                     * my[None, :, None, None, :, None]
                     * mx[None, None, :, None, None, :])
    return t.reshape(cin * hin * win, cout * oh * ow), oh, ow


def conv_transpose_toeplitz(w, hin, win, stride, padding):
    """Dense matrix for ConvTranspose2d (the adjoint of the matching Conv2d).

    w: (Cin, Cout, kh, kw) (PyTorch ConvTranspose2d layout).
    Returns (T, OH, OW) with T of shape (Cin*hin*win, Cout*OH*OW).
    """
    cin, cout, kh, kw = w.shape
    oh = (hin - 1) * stride - 2 * padding + kh
    ow = (win - 1) * stride - 2 * padding + kw
    # ConvTranspose2d == adjoint of the Conv2d whose weight is w viewed as (out=Cin, in=Cout).
    t_fwd, h_chk, w_chk = conv_toeplitz(w, oh, ow, stride, padding)
    assert (h_chk, w_chk) == (hin, win)
    return t_fwd.T, oh, ow


def fold_maxpool(t, b, oh, ow, k, stride):
    """Fold MaxPool2d(k, stride) into conv matrix `t` (shape (K, Cout*oh*ow)).

    Returns (A, bp, PH, PW): A is (k*k, K, Cout*PH*PW), one column-selected matrix
    per pooling-window corner.  pooled = relu(max_c (x @ A[c]) + bp).
    """
    cout = t.shape[1] // (oh * ow)
    ph = (oh - k) // stride + 1
    pw = (ow - k) // stride + 1
    tr = t.reshape(t.shape[0], cout, oh, ow)
    mats = []
    for i in range(k):
        for j in range(k):
            sl = tr[:, :,
                    i:i + stride * (ph - 1) + 1:stride,
                    j:j + stride * (pw - 1) + 1:stride]
            mats.append(sl.reshape(t.shape[0], cout * ph * pw))
    a = jnp.stack(mats, axis=0)                                      # (k*k, K, Cout*PH*PW)
    bp = jnp.repeat(b, ph * pw).reshape(1, cout * ph * pw)
    return a, bp, ph, pw


# ------------------------------- Pallas kernel --------------------------------

def _autoencoder_kernel(x_ref, a1_ref, b1_ref, a2_ref, b2_ref,
                        t3_ref, b3_ref, t4_ref, b4_ref, t5_ref, b5_ref, o_ref):
    x = x_ref[0]                                                     # (1, Cin*H*W)

    def gemm(h, w_ref, b_ref):
        return jnp.dot(h, w_ref[...], preferred_element_type=jnp.float32) + b_ref[...]

    def conv_relu_maxpool(h, a_ref, b_ref):
        # max over pooling-window corners, then bias + ReLU (ReLU commutes with max).
        acc = jnp.dot(h, a_ref[0], preferred_element_type=jnp.float32)
        for c in range(1, a_ref.shape[0]):
            acc = jnp.maximum(acc, jnp.dot(h, a_ref[c], preferred_element_type=jnp.float32))
        return jnp.maximum(acc + b_ref[...], 0.0)

    h = conv_relu_maxpool(x, a1_ref, b1_ref)          # Conv(1,16,3,s3,p1)+ReLU+Pool(2,2) -> (1,144)
    h = conv_relu_maxpool(h, a2_ref, b2_ref)          # Conv(16,8,3,s2,p1)+ReLU+Pool(2,1) -> (1,8)
    h = jnp.maximum(gemm(h, t3_ref, b3_ref), 0.0)     # ConvT(8,16,3,s2)+ReLU             -> (1,144)
    h = jnp.maximum(gemm(h, t4_ref, b4_ref), 0.0)     # ConvT(16,8,5,s3,p1)+ReLU          -> (1,648)
    h = jnp.tanh(gemm(h, t5_ref, b5_ref))             # ConvT(8,1,2,s2,p1)+Tanh           -> (1,256)
    o_ref[0] = h.astype(o_ref.dtype)


# ------------------------------ fused forward ---------------------------------

def autoencoder_forward(params, x):
    n, cin, hin, win = x.shape

    # Weight-side lowering (cheap, input-independent).
    t1, oh1, ow1 = conv_toeplitz(params["e1_w"], hin, win, stride=3, padding=1)
    a1, b1, ph1, pw1 = fold_maxpool(t1, params["e1_b"], oh1, ow1, k=2, stride=2)
    t2, oh2, ow2 = conv_toeplitz(params["e2_w"], ph1, pw1, stride=2, padding=1)
    a2, b2, ph2, pw2 = fold_maxpool(t2, params["e2_b"], oh2, ow2, k=2, stride=1)
    t3, oh3, ow3 = conv_transpose_toeplitz(params["d1_w"], ph2, pw2, stride=2, padding=0)
    t4, oh4, ow4 = conv_transpose_toeplitz(params["d2_w"], oh3, ow3, stride=3, padding=1)
    t5, oh5, ow5 = conv_transpose_toeplitz(params["d3_w"], oh4, ow4, stride=2, padding=1)
    b3 = jnp.repeat(params["d1_b"], oh3 * ow3).reshape(1, -1)
    b4 = jnp.repeat(params["d2_b"], oh4 * ow4).reshape(1, -1)
    b5 = jnp.repeat(params["d3_b"], oh5 * ow5).reshape(1, -1)

    din = cin * hin * win
    dout = t5.shape[1]
    x_flat = x.reshape(n, 1, din)                     # lane-dense per-image rows

    def whole(arr):
        shp = arr.shape
        return pl.BlockSpec(shp, lambda i, _s=shp: (0,) * len(_s))

    out = pl.pallas_call(
        _autoencoder_kernel,
        out_shape=jax.ShapeDtypeStruct((n, 1, dout), jnp.float32),
        grid_spec=pltpu.PrefetchScalarGridSpec(
            num_scalar_prefetch=0,
            grid=(n,),                                # batch axis -> 2 TCs on v7x
            in_specs=[pl.BlockSpec((1, 1, din), lambda i: (i, 0, 0)),
                      whole(a1), whole(b1), whole(a2), whole(b2),
                      whole(t3), whole(b3), whole(t4), whole(b4),
                      whole(t5), whole(b5)],
            out_specs=pl.BlockSpec((1, 1, dout), lambda i: (i, 0, 0)),
        ),
        compiler_params=pltpu.CompilerParams(
            dimension_semantics=("parallel",)),
    )(x_flat, a1, b1, a2, b2, t3, b3, t4, b4, t5, b5)

    cout_final = params["d3_w"].shape[1]
    return out.reshape(n, cout_final, oh5, ow5)


# --------------------------- parameters & reference ---------------------------

def _init_conv(key, cout, cin, kh, kw, transposed=False):
    kw_, kb_ = jax.random.split(key)
    if transposed:
        shape = (cin, cout, kh, kw)
        fan_in = cout * kh * kw
    else:
        shape = (cout, cin, kh, kw)
        fan_in = cin * kh * kw
    bound = 1.0 / float(fan_in) ** 0.5
    w = jax.random.uniform(kw_, shape, jnp.float32, -bound, bound)
    b = jax.random.uniform(kb_, (cout,), jnp.float32, -bound, bound)
    return w, b


def init_params(key):
    keys = jax.random.split(key, 5)
    p = {}
    p["e1_w"], p["e1_b"] = _init_conv(keys[0], 16, 1, 3, 3)          # Conv2d(1,16,3,s3,p1)
    p["e2_w"], p["e2_b"] = _init_conv(keys[1], 8, 16, 3, 3)          # Conv2d(16,8,3,s2,p1)
    p["d1_w"], p["d1_b"] = _init_conv(keys[2], 16, 8, 3, 3, True)    # ConvT(8,16,3,s2)
    p["d2_w"], p["d2_b"] = _init_conv(keys[3], 8, 16, 5, 5, True)    # ConvT(16,8,5,s3,p1)
    p["d3_w"], p["d3_b"] = _init_conv(keys[4], 1, 8, 2, 2, True)     # ConvT(8,1,2,s2,p1)
    return p


def reference_forward(params, x):
    """Pure-JAX (XLA) reference, used only to verify the Pallas kernel numerically."""
    dn = ("NCHW", "OIHW", "NCHW")

    def conv(h, w, b, stride, padding):
        y = jax.lax.conv_general_dilated(
            h, w, window_strides=(stride, stride),
            padding=[(padding, padding), (padding, padding)], dimension_numbers=dn)
        return y + b.reshape(1, -1, 1, 1)

    def conv_t(h, w, b, stride, padding):
        kh, kw = w.shape[2], w.shape[3]
        wc = jnp.flip(w, axis=(2, 3)).transpose(1, 0, 2, 3)
        y = jax.lax.conv_general_dilated(
            h, wc, window_strides=(1, 1),
            padding=[(kh - 1 - padding,) * 2, (kw - 1 - padding,) * 2],
            lhs_dilation=(stride, stride), dimension_numbers=dn)
        return y + b.reshape(1, -1, 1, 1)

    def maxpool(h, k, stride):
        return jax.lax.reduce_window(h, -jnp.inf, jax.lax.max,
                                     (1, 1, k, k), (1, 1, stride, stride), "VALID")

    h = jnp.maximum(conv(x, params["e1_w"], params["e1_b"], 3, 1), 0.0)
    h = maxpool(h, 2, 2)
    h = jnp.maximum(conv(h, params["e2_w"], params["e2_b"], 2, 1), 0.0)
    h = maxpool(h, 2, 1)
    h = jnp.maximum(conv_t(h, params["d1_w"], params["d1_b"], 2, 0), 0.0)
    h = jnp.maximum(conv_t(h, params["d2_w"], params["d2_b"], 3, 1), 0.0)
    h = jnp.tanh(conv_t(h, params["d3_w"], params["d3_b"], 2, 1))
    return h


if __name__ == "__main__":
    key = jax.random.PRNGKey(0)
    pkey, xkey = jax.random.split(key)
    params = init_params(pkey)
    # NCHW input; 16x16 spatial round-trips through the architecture back to 16x16.
    x = jax.random.normal(xkey, (2, 1, 16, 16), dtype=jnp.float32)

    fwd = jax.jit(autoencoder_forward)
    out = jax.block_until_ready(fwd(params, x))

    assert out.shape == (2, 1, 16, 16), out.shape
    assert out.dtype == jnp.float32
    assert bool(jnp.all(jnp.isfinite(out)))
    assert bool(jnp.all(jnp.abs(out) <= 1.0))          # tanh output range

    ref = reference_forward(params, x)
    max_err = float(jnp.max(jnp.abs(out - ref)))
    assert max_err < 1e-4, f"mismatch vs reference: {max_err}"

    print("KERNEL_OK")
</pallas_src>

<mosaic_0001>
module attributes {stable_mosaic.version = 11 : i64} {
  func.func @_autoencoder_kernel(%arg0: i32, %arg1: memref<1x1x256xf32, #tpu.memory_space<vmem>>, %arg2: memref<4x256x144xf32, #tpu.memory_space<vmem>>, %arg3: memref<1x144xf32, #tpu.memory_space<vmem>>, %arg4: memref<4x144x8xf32, #tpu.memory_space<vmem>>, %arg5: memref<1x8xf32, #tpu.memory_space<vmem>>, %arg6: memref<8x144xf32, #tpu.memory_space<vmem>>, %arg7: memref<1x144xf32, #tpu.memory_space<vmem>>, %arg8: memref<144x648xf32, #tpu.memory_space<vmem>>, %arg9: memref<1x648xf32, #tpu.memory_space<vmem>>, %arg10: memref<648x256xf32, #tpu.memory_space<vmem>>, %arg11: memref<1x256xf32, #tpu.memory_space<vmem>>, %arg12: memref<1x1x256xf32, #tpu.memory_space<vmem>>) attributes {dimension_semantics = [#tpu.dimension_semantics<parallel>], iteration_bounds = array<i64: 2>, scalar_prefetch = 0 : i64, scratch_operands = 0 : i64, tpu.core_type = #tpu.core_type<tc>, window_params = [{transform_indices = @transform_0, window_bounds = array<i64: 1, 1, 256>}, {pipeline_mode = #tpu.pipeline_mode<synchronous>, transform_indices = @transform_1, window_bounds = array<i64: 4, 256, 144>}, {pipeline_mode = #tpu.pipeline_mode<synchronous>, transform_indices = @transform_2, window_bounds = array<i64: 1, 144>}, {pipeline_mode = #tpu.pipeline_mode<synchronous>, transform_indices = @transform_3, window_bounds = array<i64: 4, 144, 8>}, {pipeline_mode = #tpu.pipeline_mode<synchronous>, transform_indices = @transform_4, window_bounds = array<i64: 1, 8>}, {pipeline_mode = #tpu.pipeline_mode<synchronous>, transform_indices = @transform_5, window_bounds = array<i64: 8, 144>}, {pipeline_mode = #tpu.pipeline_mode<synchronous>, transform_indices = @transform_6, window_bounds = array<i64: 1, 144>}, {pipeline_mode = #tpu.pipeline_mode<synchronous>, transform_indices = @transform_7, window_bounds = array<i64: 144, 648>}, {pipeline_mode = #tpu.pipeline_mode<synchronous>, transform_indices = @transform_8, window_bounds = array<i64: 1, 648>}, {pipeline_mode = #tpu.pipeline_mode<synchronous>, transform_indices = @transform_9, window_bounds = array<i64: 648, 256>}, {pipeline_mode = #tpu.pipeline_mode<synchronous>, transform_indices = @transform_10, window_bounds = array<i64: 1, 256>}, {transform_indices = @transform_11, window_bounds = array<i64: 1, 1, 256>}]} {
    %c0 = arith.constant 0 : index
    %c0_0 = arith.constant 0 : index
    %c0_1 = arith.constant 0 : index
    %0 = vector.load %arg1[%c0, %c0_0, %c0_1] : memref<1x1x256xf32, #tpu.memory_space<vmem>>, vector<1x1x256xf32>
    %1 = vector.shape_cast %0 : vector<1x1x256xf32> to vector<1x256xf32>
    %c0_2 = arith.constant 0 : index
    %c0_3 = arith.constant 0 : index
    %c0_4 = arith.constant 0 : index
    %2 = vector.load %arg2[%c0_2, %c0_3, %c0_4] : memref<4x256x144xf32, #tpu.memory_space<vmem>>, vector<1x256x144xf32>
    %3 = vector.shape_cast %2 : vector<1x256x144xf32> to vector<256x144xf32>
    %cst = arith.constant dense<0.000000e+00> : vector<1x144xf32>
    %4 = tpu.matmul %1, %3, %cst {dimension_numbers = #tpu.dot_dimension_numbers<[1], [0], [0], [1], [0, 0, 1, 1], [], []>} : vector<1x256xf32>, vector<256x144xf32>, vector<1x144xf32> -> vector<1x144xf32>
    %c1 = arith.constant 1 : index
    %c0_5 = arith.constant 0 : index
    %c0_6 = arith.constant 0 : index
    %5 = vector.load %arg2[%c1, %c0_5, %c0_6] : memref<4x256x144xf32, #tpu.memory_space<vmem>>, vector<1x256x144xf32>
    %6 = vector.shape_cast %5 : vector<1x256x144xf32> to vector<256x144xf32>
    %cst_7 = arith.constant dense<0.000000e+00> : vector<1x144xf32>
    %7 = tpu.matmul %1, %6, %cst_7 {dimension_numbers = #tpu.dot_dimension_numbers<[1], [0], [0], [1], [0, 0, 1, 1], [], []>} : vector<1x256xf32>, vector<256x144xf32>, vector<1x144xf32> -> vector<1x144xf32>
    %8 = arith.maximumf %4, %7 : vector<1x144xf32>
    %c2 = arith.constant 2 : index
    %c0_8 = arith.constant 0 : index
    %c0_9 = arith.constant 0 : index
    %9 = vector.load %arg2[%c2, %c0_8, %c0_9] : memref<4x256x144xf32, #tpu.memory_space<vmem>>, vector<1x256x144xf32>
    %10 = vector.shape_cast %9 : vector<1x256x144xf32> to vector<256x144xf32>
    %cst_10 = arith.constant dense<0.000000e+00> : vector<1x144xf32>
    %11 = tpu.matmul %1, %10, %cst_10 {dimension_numbers = #tpu.dot_dimension_numbers<[1], [0], [0], [1], [0, 0, 1, 1], [], []>} : vector<1x256xf32>, vector<256x144xf32>, vector<1x144xf32> -> vector<1x144xf32>
    %12 = arith.maximumf %8, %11 : vector<1x144xf32>
    %c3 = arith.constant 3 : index
    %c0_11 = arith.constant 0 : index
    %c0_12 = arith.constant 0 : index
    %13 = vector.load %arg2[%c3, %c0_11, %c0_12] : memref<4x256x144xf32, #tpu.memory_space<vmem>>, vector<1x256x144xf32>
    %14 = vector.shape_cast %13 : vector<1x256x144xf32> to vector<256x144xf32>
    %cst_13 = arith.constant dense<0.000000e+00> : vector<1x144xf32>
    %15 = tpu.matmul %1, %14, %cst_13 {dimension_numbers = #tpu.dot_dimension_numbers<[1], [0], [0], [1], [0, 0, 1, 1], [], []>} : vector<1x256xf32>, vector<256x144xf32>, vector<1x144xf32> -> vector<1x144xf32>
    %16 = arith.maximumf %12, %15 : vector<1x144xf32>
    %c0_14 = arith.constant 0 : index
    %c0_15 = arith.constant 0 : index
    %17 = vector.load %arg3[%c0_14, %c0_15] : memref<1x144xf32, #tpu.memory_space<vmem>>, vector<1x144xf32>
    %18 = arith.addf %16, %17 : vector<1x144xf32>
    %cst_16 = arith.constant 0.000000e+00 : f32
    %19 = vector.broadcast %cst_16 : f32 to vector<1x144xf32>
    %20 = arith.maximumf %18, %19 : vector<1x144xf32>
    %c0_17 = arith.constant 0 : index
    %c0_18 = arith.constant 0 : index
    %c0_19 = arith.constant 0 : index
    %21 = vector.load %arg4[%c0_17, %c0_18, %c0_19] : memref<4x144x8xf32, #tpu.memory_space<vmem>>, vector<1x144x8xf32>
    %22 = vector.shape_cast %21 : vector<1x144x8xf32> to vector<144x8xf32>
    %cst_20 = arith.constant dense<0.000000e+00> : vector<1x8xf32>
    %23 = tpu.matmul %20, %22, %cst_20 {dimension_numbers = #tpu.dot_dimension_numbers<[1], [0], [0], [1], [0, 0, 1, 1], [], []>} : vector<1x144xf32>, vector<144x8xf32>, vector<1x8xf32> -> vector<1x8xf32>
    %c1_21 = arith.constant 1 : index
    %c0_22 = arith.constant 0 : index
    %c0_23 = arith.constant 0 : index
    %24 = vector.load %arg4[%c1_21, %c0_22, %c0_23] : memref<4x144x8xf32, #tpu.memory_space<vmem>>, vector<1x144x8xf32>
    %25 = vector.shape_cast %24 : vector<1x144x8xf32> to vector<144x8xf32>
    %cst_24 = arith.constant dense<0.000000e+00> : vector<1x8xf32>
    %26 = tpu.matmul %20, %25, %cst_24 {dimension_numbers = #tpu.dot_dimension_numbers<[1], [0], [0], [1], [0, 0, 1, 1], [], []>} : vector<1x144xf32>, vector<144x8xf32>, vector<1x8xf32> -> vector<1x8xf32>
    %27 = arith.maximumf %23, %26 : vector<1x8xf32>
    %c2_25 = arith.constant 2 : index
    %c0_26 = arith.constant 0 : index
    %c0_27 = arith.constant 0 : index
    %28 = vector.load %arg4[%c2_25, %c0_26, %c0_27] : memref<4x144x8xf32, #tpu.memory_space<vmem>>, vector<1x144x8xf32>
    %29 = vector.shape_cast %28 : vector<1x144x8xf32> to vector<144x8xf32>
    %cst_28 = arith.constant dense<0.000000e+00> : vector<1x8xf32>
    %30 = tpu.matmul %20, %29, %cst_28 {dimension_numbers = #tpu.dot_dimension_numbers<[1], [0], [0], [1], [0, 0, 1, 1], [], []>} : vector<1x144xf32>, vector<144x8xf32>, vector<1x8xf32> -> vector<1x8xf32>
    %31 = arith.maximumf %27, %30 : vector<1x8xf32>
    %c3_29 = arith.constant 3 : index
    %c0_30 = arith.constant 0 : index
    %c0_31 = arith.constant 0 : index
    %32 = vector.load %arg4[%c3_29, %c0_30, %c0_31] : memref<4x144x8xf32, #tpu.memory_space<vmem>>, vector<1x144x8xf32>
    %33 = vector.shape_cast %32 : vector<1x144x8xf32> to vector<144x8xf32>
    %cst_32 = arith.constant dense<0.000000e+00> : vector<1x8xf32>
    %34 = tpu.matmul %20, %33, %cst_32 {dimension_numbers = #tpu.dot_dimension_numbers<[1], [0], [0], [1], [0, 0, 1, 1], [], []>} : vector<1x144xf32>, vector<144x8xf32>, vector<1x8xf32> -> vector<1x8xf32>
    %35 = arith.maximumf %31, %34 : vector<1x8xf32>
    %c0_33 = arith.constant 0 : index
    %c0_34 = arith.constant 0 : index
    %36 = vector.load %arg5[%c0_33, %c0_34] : memref<1x8xf32, #tpu.memory_space<vmem>>, vector<1x8xf32>
    %37 = arith.addf %35, %36 : vector<1x8xf32>
    %cst_35 = arith.constant 0.000000e+00 : f32
    %38 = vector.broadcast %cst_35 : f32 to vector<1x8xf32>
    %39 = arith.maximumf %37, %38 : vector<1x8xf32>
    %c0_36 = arith.constant 0 : index
    %c0_37 = arith.constant 0 : index
    %40 = vector.load %arg6[%c0_36, %c0_37] : memref<8x144xf32, #tpu.memory_space<vmem>>, vector<8x144xf32>
    %cst_38 = arith.constant dense<0.000000e+00> : vector<1x144xf32>
    %41 = tpu.matmul %39, %40, %cst_38 {dimension_numbers = #tpu.dot_dimension_numbers<[1], [0], [0], [1], [0, 0, 1, 1], [], []>} : vector<1x8xf32>, vector<8x144xf32>, vector<1x144xf32> -> vector<1x144xf32>
    %c0_39 = arith.constant 0 : index
    %c0_40 = arith.constant 0 : index
    %42 = vector.load %arg7[%c0_39, %c0_40] : memref<1x144xf32, #tpu.memory_space<vmem>>, vector<1x144xf32>
    %43 = arith.addf %41, %42 : vector<1x144xf32>
    %cst_41 = arith.constant 0.000000e+00 : f32
    %44 = vector.broadcast %cst_41 : f32 to vector<1x144xf32>
    %45 = arith.maximumf %43, %44 : vector<1x144xf32>
    %c0_42 = arith.constant 0 : index
    %c0_43 = arith.constant 0 : index
    %46 = vector.load %arg8[%c0_42, %c0_43] : memref<144x648xf32, #tpu.memory_space<vmem>>, vector<144x648xf32>
    %cst_44 = arith.constant dense<0.000000e+00> : vector<1x648xf32>
    %47 = tpu.matmul %45, %46, %cst_44 {dimension_numbers = #tpu.dot_dimension_numbers<[1], [0], [0], [1], [0, 0, 1, 1], [], []>} : vector<1x144xf32>, vector<144x648xf32>, vector<1x648xf32> -> vector<1x648xf32>
    %c0_45 = arith.constant 0 : index
    %c0_46 = arith.constant 0 : index
    %48 = vector.load %arg9[%c0_45, %c0_46] : memref<1x648xf32, #tpu.memory_space<vmem>>, vector<1x648xf32>
    %49 = arith.addf %47, %48 : vector<1x648xf32>
    %cst_47 = arith.constant 0.000000e+00 : f32
    %50 = vector.broadcast %cst_47 : f32 to vector<1x648xf32>
    %51 = arith.maximumf %49, %50 : vector<1x648xf32>
    %c0_48 = arith.constant 0 : index
    %c0_49 = arith.constant 0 : index
    %52 = vector.load %arg10[%c0_48, %c0_49] : memref<648x256xf32, #tpu.memory_space<vmem>>, vector<648x256xf32>
    %cst_50 = arith.constant dense<0.000000e+00> : vector<1x256xf32>
    %53 = tpu.matmul %51, %52, %cst_50 {dimension_numbers = #tpu.dot_dimension_numbers<[1], [0], [0], [1], [0, 0, 1, 1], [], []>} : vector<1x648xf32>, vector<648x256xf32>, vector<1x256xf32> -> vector<1x256xf32>
    %c0_51 = arith.constant 0 : index
    %c0_52 = arith.constant 0 : index
    %54 = vector.load %arg11[%c0_51, %c0_52] : memref<1x256xf32, #tpu.memory_space<vmem>>, vector<1x256xf32>
    %55 = arith.addf %53, %54 : vector<1x256xf32>
    %56 = math.tanh %55 : vector<1x256xf32>
    %c0_53 = arith.constant 0 : index
    %c0_54 = arith.constant 0 : index
    %c0_55 = arith.constant 0 : index
    %57 = vector.load %arg12[%c0_53, %c0_54, %c0_55] : memref<1x1x256xf32, #tpu.memory_space<vmem>>, vector<1x1x256xf32>
    %58 = vector.shape_cast %57 : vector<1x1x256xf32> to vector<1x256xf32>
    %59 = vector.shape_cast %56 : vector<1x256xf32> to vector<1x1x256xf32>
    tpu.vector_store %arg12[%c0_53, %c0_54, %c0_55], %59 {strides = array<i32>} : memref<1x1x256xf32, #tpu.memory_space<vmem>>, vector<1x1x256xf32>,
    return
  }
  func.func @transform_0(%arg0: i32) -> (i32, i32, i32) {
    %c0_i32 = arith.constant 0 : i32
    %c0_i32_0 = arith.constant 0 : i32
    %c0_i32_1 = arith.constant 0 : i32
    return %arg0, %c0_i32, %c0_i32_0 : i32, i32, i32
  }
  func.func @transform_1(%arg0: i32) -> (i32, i32, i32) {
    %c0_i32 = arith.constant 0 : i32
    %c0_i32_0 = arith.constant 0 : i32
    %c0_i32_1 = arith.constant 0 : i32
    %c0_i32_2 = arith.constant 0 : i32
    return %c0_i32, %c0_i32_0, %c0_i32_1 : i32, i32, i32
  }
  func.func @transform_2(%arg0: i32) -> (i32, i32) {
    %c0_i32 = arith.constant 0 : i32
    %c0_i32_0 = arith.constant 0 : i32
    %c0_i32_1 = arith.constant 0 : i32
    return %c0_i32, %c0_i32_0 : i32, i32
  }
  func.func @transform_3(%arg0: i32) -> (i32, i32, i32) {
    %c0_i32 = arith.constant 0 : i32
    %c0_i32_0 = arith.constant 0 : i32
    %c0_i32_1 = arith.constant 0 : i32
    %c0_i32_2 = arith.constant 0 : i32
    return %c0_i32, %c0_i32_0, %c0_i32_1 : i32, i32, i32
  }
  func.func @transform_4(%arg0: i32) -> (i32, i32) {
    %c0_i32 = arith.constant 0 : i32
    %c0_i32_0 = arith.constant 0 : i32
    %c0_i32_1 = arith.constant 0 : i32
    return %c0_i32, %c0_i32_0 : i32, i32
  }
  func.func @transform_5(%arg0: i32) -> (i32, i32) {
    %c0_i32 = arith.constant 0 : i32
    %c0_i32_0 = arith.constant 0 : i32
    %c0_i32_1 = arith.constant 0 : i32
    return %c0_i32, %c0_i32_0 : i32, i32
  }
  func.func @transform_6(%arg0: i32) -> (i32, i32) {
    %c0_i32 = arith.constant 0 : i32
    %c0_i32_0 = arith.constant 0 : i32
    %c0_i32_1 = arith.constant 0 : i32
    return %c0_i32, %c0_i32_0 : i32, i32
  }
  func.func @transform_7(%arg0: i32) -> (i32, i32) {
    %c0_i32 = arith.constant 0 : i32
    %c0_i32_0 = arith.constant 0 : i32
    %c0_i32_1 = arith.constant 0 : i32
    return %c0_i32, %c0_i32_0 : i32, i32
  }
  func.func @transform_8(%arg0: i32) -> (i32, i32) {
    %c0_i32 = arith.constant 0 : i32
    %c0_i32_0 = arith.constant 0 : i32
    %c0_i32_1 = arith.constant 0 : i32
    return %c0_i32, %c0_i32_0 : i32, i32
  }
  func.func @transform_9(%arg0: i32) -> (i32, i32) {
    %c0_i32 = arith.constant 0 : i32
    %c0_i32_0 = arith.constant 0 : i32
    %c0_i32_1 = arith.constant 0 : i32
    return %c0_i32, %c0_i32_0 : i32, i32
  }
  func.func @transform_10(%arg0: i32) -> (i32, i32) {
    %c0_i32 = arith.constant 0 : i32
    %c0_i32_0 = arith.constant 0 : i32
    %c0_i32_1 = arith.constant 0 : i32
    return %c0_i32, %c0_i32_0 : i32, i32
  }
  func.func @transform_11(%arg0: i32) -> (i32, i32, i32) {
    %c0_i32 = arith.constant 0 : i32
    %c0_i32_0 = arith.constant 0 : i32
    %c0_i32_1 = arith.constant 0 : i32
    return %arg0, %c0_i32, %c0_i32_0 : i32, i32, i32
  }
}

</mosaic_0001>

<llo_original>
// kernel: autoencoder_forward.1
$region0: #{autoencoder_forward.1}
  #allocation0 [shape = 'u32[]', space=smem, size = 0x4, offset = 0x4, fixed_abs, tag = 'smem constant byte address 0x4 - core index']
  #allocation1 [shape = 'u32[144,128]{1,0:T(1,128)}', space=vmem, size = 0x12000, scoped, tag = 'internal scratch']
  %s0 = inlined_call_operand.vmem [shape: f32[2,1,256], index: 0, kind: input, shape index: {}]
  %s1 = inlined_call_operand.vmem [shape: f32[4,256,144], index: 1, kind: input, shape index: {}]
  %s2 = inlined_call_operand.vmem [shape: f32[1,144], index: 2, kind: input, shape index: {}]
  %s3 = inlined_call_operand.vmem [shape: f32[4,144,8], index: 3, kind: input, shape index: {}]
  %s4 = inlined_call_operand.vmem [shape: f32[1,8], index: 4, kind: input, shape index: {}]
  %s5 = inlined_call_operand.vmem [shape: f32[8,144], index: 5, kind: input, shape index: {}]
  %s6 = inlined_call_operand.vmem [shape: f32[1,144], index: 6, kind: input, shape index: {}]
  %s7 = inlined_call_operand.vmem [shape: f32[144,648], index: 7, kind: input, shape index: {}]
  %s8 = inlined_call_operand.vmem [shape: f32[1,648], index: 8, kind: input, shape index: {}]
  %s9 = inlined_call_operand.vmem [shape: f32[648,256], index: 9, kind: input, shape index: {}]
  %s10 = inlined_call_operand.vmem [shape: f32[1,256], index: 10, kind: input, shape index: {}]
  %s11 = inlined_call_operand.vmem [shape: f32[2,1,256], index: 11, kind: output, shape index: {}]
  %s12 = sld [smem:[#allocation0]]
  $region77: #{autoencoder_forward.1} parent=0
    _
  %s14 = ssub.s32 1, %s12
  %s15 = scalar_select 0, %s14, %s12
  loop: start=0, step=1, limit=4
  $region2: #{autoencoder_forward.1} parent=0 // loop_pre_header
    _
  $region3: #{autoencoder_forward.1} parent=0 // loop_header
    %s17 = sphi 0, %s21
    %p18 = scmp.ge.s32.totalorder %s17, 4
    %s27 = sphi 0, %s29
    %s30 = sphi 0, %s27
    %s31 = sphi 0, %s30
    %s47 = sphi 0, %s31
    %s51 = sphi 0, %s51
    %s53 = sphi 0, %s51
    %s54 = sphi 0, %s53
    %s68 = sphi 0, %s54
    %s72 = sphi 0, %s72
    %s74 = sphi 0, %s72
    %s75 = sphi 0, %s74
    %s89 = sphi 0, %s75
    %s93 = sphi 0, %s93
    %s95 = sphi 0, %s93
    %s96 = sphi 0, %s95
    %s110 = sphi 0, %s96
    %s114 = sphi 0, %s114
    %s116 = sphi 0, %s114
    %s117 = sphi 0, %s116
    %s131 = sphi 0, %s117
    %s135 = sphi 0, %s135
    %s137 = sphi 0, %s135
    %s138 = sphi 0, %s137
    %s152 = sphi 0, %s138
    %s156 = sphi 0, %s156
    %s158 = sphi 0, %s156
    %s159 = sphi 0, %s158
    %s173 = sphi 0, %s159
    %s177 = sphi 0, %s177
    %s179 = sphi 0, %s177
    %s180 = sphi 0, %s179
    %s194 = sphi 0, %s180
    %s198 = sphi 0, %s198
    %s200 = sphi 0, %s198
    %s201 = sphi 0, %s200
    %s215 = sphi 0, %s201
    %s219 = sphi 0, %s219
    %s221 = sphi 0, %s219
    %s222 = sphi 0, %s221
    %s236 = sphi 0, %s222
    %s240 = sphi 0, %s240
    %s242 = sphi 0, %s240
    %s243 = sphi 0, %s242
    %s257 = sphi 0, %s243
    %s263 = sphi 0, %s265
    %s266 = sphi 0, %s263
    %s267 = sphi 0, %s266
    %s283 = sphi 0, %s267
  $region4: #{autoencoder_forward.1} parent=0 // loop_header_branch
    %20 = sbr.rel (%p18) target = $region8
  $region5: #{autoencoder_forward.1} parent=0 // loop_body
    %s22 = ssub.s32 %s17, 1
    %s23 = ssub.s32 %s17, 2
    %s24 = sadd.s32 %s17, 1
    %s25 = ssub.s32 %s17, %s24
    %p26 = scmp.eq.s32.totalorder %s25, 0
    %s28 = sadd.s32 %s27, 1
    %s29 = scalar_select %p26, %s27, %s28
    %p32 = pneg %p26
    %p33 = scmp.eq.s32.totalorder %s17, 1
    %p34 = por %p32, %p33
    %p35 = scmp.ne.s32.totalorder %s27, %s30
    %p36 = scmp.eq.s32.totalorder %s17, 0
    %p37 = por %p35, %p36
    %p38 = scmp.ne.s32.totalorder %s27, %s30
    %p39 = scmp.eq.s32.totalorder %s22, 1
    %p40 = por %p38, %p39
    %p41 = scmp.ne.s32.totalorder %s30, %s31
    %p42 = scmp.eq.s32.totalorder %s22, 0
    %p43 = por %p41, %p42
    %p44 = scmp.ne.s32.totalorder %s30, %s31
    %p45 = scmp.eq.s32.totalorder %s23, 1
    %p46 = por %p44, %p45
    %p48 = scmp.ne.s32.totalorder %s31, %s47
    %p49 = scmp.eq.s32.totalorder %s23, 0
    %p50 = por %p48, %p49
    %s52 = sadd.s32 %s51, 1
    %p55 = scmp.eq.s32.totalorder %s17, 1
    %p56 = scmp.ne.s32.totalorder %s51, %s53
    %p57 = scmp.eq.s32.totalorder %s17, 0
    %p58 = por %p56, %p57
    %p59 = scmp.ne.s32.totalorder %s51, %s53
    %p60 = scmp.eq.s32.totalorder %s22, 1
    %p61 = por %p59, %p60
    %p62 = scmp.ne.s32.totalorder %s53, %s54
    %p63 = scmp.eq.s32.totalorder %s22, 0
    %p64 = por %p62, %p63
    %p65 = scmp.ne.s32.totalorder %s53, %s54
    %p66 = scmp.eq.s32.totalorder %s23, 1
    %p67 = por %p65, %p66
    %p69 = scmp.ne.s32.totalorder %s54, %s68
    %p70 = scmp.eq.s32.totalorder %s23, 0
    %p71 = por %p69, %p70
    %s73 = sadd.s32 %s72, 1
    %p76 = scmp.eq.s32.totalorder %s17, 1
    %p77 = scmp.ne.s32.totalorder %s72, %s74
    %p78 = scmp.eq.s32.totalorder %s17, 0
    %p79 = por %p77, %p78
    %p80 = scmp.ne.s32.totalorder %s72, %s74
    %p81 = scmp.eq.s32.totalorder %s22, 1
    %p82 = por %p80, %p81
    %p83 = scmp.ne.s32.totalorder %s74, %s75
    %p84 = scmp.eq.s32.totalorder %s22, 0
    %p85 = por %p83, %p84
    %p86 = scmp.ne.s32.totalorder %s74, %s75
    %p87 = scmp.eq.s32.totalorder %s23, 1
    %p88 = por %p86, %p87
    %p90 = scmp.ne.s32.totalorder %s75, %s89
    %p91 = scmp.eq.s32.totalorder %s23, 0
    %p92 = por %p90, %p91
    %s94 = sadd.s32 %s93, 1
    %p97 = scmp.eq.s32.totalorder %s17, 1
    %p98 = scmp.ne.s32.totalorder %s93, %s95
    %p99 = scmp.eq.s32.totalorder %s17, 0
    %p100 = por %p98, %p99
    %p101 = scmp.ne.s32.totalorder %s93, %s95
    %p102 = scmp.eq.s32.totalorder %s22, 1
    %p103 = por %p101, %p102
    %p104 = scmp.ne.s32.totalorder %s95, %s96
    %p105 = scmp.eq.s32.totalorder %s22, 0
    %p106 = por %p104, %p105
    %p107 = scmp.ne.s32.totalorder %s95, %s96
    %p108 = scmp.eq.s32.totalorder %s23, 1
    %p109 = por %p107, %p108
    %p111 = scmp.ne.s32.totalorder %s96, %s110
    %p112 = scmp.eq.s32.totalorder %s23, 0
    %p113 = por %p111, %p112
    %s115 = sadd.s32 %s114, 1
    %p118 = scmp.eq.s32.totalorder %s17, 1
    %p119 = scmp.ne.s32.totalorder %s114, %s116
    %p120 = scmp.eq.s32.totalorder %s17, 0
    %p121 = por %p119, %p120
    %p122 = scmp.ne.s32.totalorder %s114, %s116
    %p123 = scmp.eq.s32.totalorder %s22, 1
    %p124 = por %p122, %p123
    %p125 = scmp.ne.s32.totalorder %s116, %s117
    %p126 = scmp.eq.s32.totalorder %s22, 0
    %p127 = por %p125, %p126
    %p128 = scmp.ne.s32.totalorder %s116, %s117
    %p129 = scmp.eq.s32.totalorder %s23, 1
    %p130 = por %p128, %p129
    %p132 = scmp.ne.s32.totalorder %s117, %s131
    %p133 = scmp.eq.s32.totalorder %s23, 0
    %p134 = por %p132, %p133
    %s136 = sadd.s32 %s135, 1
    %p139 = scmp.eq.s32.totalorder %s17, 1
    %p140 = scmp.ne.s32.totalorder %s135, %s137
    %p141 = scmp.eq.s32.totalorder %s17, 0
    %p142 = por %p140, %p141
    %p143 = scmp.ne.s32.totalorder %s135, %s137
    %p144 = scmp.eq.s32.totalorder %s22, 1
    %p145 = por %p143, %p144
    %p146 = scmp.ne.s32.totalorder %s137, %s138
    %p147 = scmp.eq.s32.totalorder %s22, 0
    %p148 = por %p146, %p147
    %p149 = scmp.ne.s32.totalorder %s137, %s138
    %p150 = scmp.eq.s32.totalorder %s23, 1
    %p151 = por %p149, %p150
    %p153 = scmp.ne.s32.totalorder %s138, %s152
    %p154 = scmp.eq.s32.totalorder %s23, 0
    %p155 = por %p153, %p154
    %s157 = sadd.s32 %s156, 1
    %p160 = scmp.eq.s32.totalorder %s17, 1
    %p161 = scmp.ne.s32.totalorder %s156, %s158
    %p162 = scmp.eq.s32.totalorder %s17, 0
    %p163 = por %p161, %p162
    %p164 = scmp.ne.s32.totalorder %s156, %s158
    %p165 = scmp.eq.s32.totalorder %s22, 1
    %p166 = por %p164, %p165
    %p167 = scmp.ne.s32.totalorder %s158, %s159
    %p168 = scmp.eq.s32.totalorder %s22, 0
    %p169 = por %p167, %p168
    %p170 = scmp.ne.s32.totalorder %s158, %s159
    %p171 = scmp.eq.s32.totalorder %s23, 1
    %p172 = por %p170, %p171
    %p174 = scmp.ne.s32.totalorder %s159, %s173
    %p175 = scmp.eq.s32.totalorder %s23, 0
    %p176 = por %p174, %p175
    %s178 = sadd.s32 %s177, 1
    %p181 = scmp.eq.s32.totalorder %s17, 1
    %p182 = scmp.ne.s32.totalorder %s177, %s179
    %p183 = scmp.eq.s32.totalorder %s17, 0
    %p184 = por %p182, %p183
    %p185 = scmp.ne.s32.totalorder %s177, %s179
    %p186 = scmp.eq.s32.totalorder %s22, 1
    %p187 = por %p185, %p186
    %p188 = scmp.ne.s32.totalorder %s179, %s180
    %p189 = scmp.eq.s32.totalorder %s22, 0
    %p190 = por %p188, %p189
    %p191 = scmp.ne.s32.totalorder %s179, %s180
    %p192 = scmp.eq.s32.totalorder %s23, 1
    %p193 = por %p191, %p192
    %p195 = scmp.ne.s32.totalorder %s180, %s194
    %p196 = scmp.eq.s32.totalorder %s23, 0
    %p197 = por %p195, %p196
    %s199 = sadd.s32 %s198, 1
    %p202 = scmp.eq.s32.totalorder %s17, 1
    %p203 = scmp.ne.s32.totalorder %s198, %s200
    %p204 = scmp.eq.s32.totalorder %s17, 0
    %p205 = por %p203, %p204
    %p206 = scmp.ne.s32.totalorder %s198, %s200
    %p207 = scmp.eq.s32.totalorder %s22, 1
    %p208 = por %p206, %p207
    %p209 = scmp.ne.s32.totalorder %s200, %s201
    %p210 = scmp.eq.s32.totalorder %s22, 0
    %p211 = por %p209, %p210
    %p212 = scmp.ne.s32.totalorder %s200, %s201
    %p213 = scmp.eq.s32.totalorder %s23, 1
    %p214 = por %p212, %p213
    %p216 = scmp.ne.s32.totalorder %s201, %s215
    %p217 = scmp.eq.s32.totalorder %s23, 0
    %p218 = por %p216, %p217
    %s220 = sadd.s32 %s219, 1
    %p223 = scmp.eq.s32.totalorder %s17, 1
    %p224 = scmp.ne.s32.totalorder %s219, %s221
    %p225 = scmp.eq.s32.totalorder %s17, 0
    %p226 = por %p224, %p225
    %p227 = scmp.ne.s32.totalorder %s219, %s221
    %p228 = scmp.eq.s32.totalorder %s22, 1
    %p229 = por %p227, %p228
    %p230 = scmp.ne.s32.totalorder %s221, %s222
    %p231 = scmp.eq.s32.totalorder %s22, 0
    %p232 = por %p230, %p231
    %p233 = scmp.ne.s32.totalorder %s221, %s222
    %p234 = scmp.eq.s32.totalorder %s23, 1
    %p235 = por %p233, %p234
    %p237 = scmp.ne.s32.totalorder %s222, %s236
    %p238 = scmp.eq.s32.totalorder %s23, 0
    %p239 = por %p237, %p238
    %s241 = sadd.s32 %s240, 1
    %p244 = scmp.eq.s32.totalorder %s17, 1
    %p245 = scmp.ne.s32.totalorder %s240, %s242
    %p246 = scmp.eq.s32.totalorder %s17, 0
    %p247 = por %p245, %p246
    %p248 = scmp.ne.s32.totalorder %s240, %s242
    %p249 = scmp.eq.s32.totalorder %s22, 1
    %p250 = por %p248, %p249
    %p251 = scmp.ne.s32.totalorder %s242, %s243
    %p252 = scmp.eq.s32.totalorder %s22, 0
    %p253 = por %p251, %p252
    %p254 = scmp.ne.s32.totalorder %s242, %s243
    %p255 = scmp.eq.s32.totalorder %s23, 1
    %p256 = por %p254, %p255
    %p258 = scmp.ne.s32.totalorder %s243, %s257
    %p259 = scmp.eq.s32.totalorder %s23, 0
    %p260 = por %p258, %p259
    %s261 = ssub.s32 %s17, %s24
    %p262 = scmp.eq.s32.totalorder %s261, 0
    %s264 = sadd.s32 %s263, 1
    %s265 = scalar_select %p262, %s263, %s264
    %p268 = pneg %p262
    %p269 = scmp.eq.s32.totalorder %s17, 1
    %p270 = por %p268, %p269
    %p271 = scmp.ne.s32.totalorder %s263, %s266
    %p272 = scmp.eq.s32.totalorder %s17, 0
    %p273 = por %p271, %p272
    %p274 = scmp.ne.s32.totalorder %s263, %s266
    %p275 = scmp.eq.s32.totalorder %s22, 1
    %p276 = por %p274, %p275
    %p277 = scmp.ne.s32.totalorder %s266, %s267
    %p278 = scmp.eq.s32.totalorder %s22, 0
    %p279 = por %p277, %p278
    %p280 = scmp.ne.s32.totalorder %s266, %s267
    %p281 = scmp.eq.s32.totalorder %s23, 1
    %p282 = por %p280, %p281
    %p284 = scmp.ne.s32.totalorder %s267, %s283
    %p285 = scmp.eq.s32.totalorder %s23, 0
    %p286 = por %p284, %p285
    %p287 = scmp.le.s32.totalorder 1, %s17
    %p288 = scmp.lt.s32.totalorder %s17, 3
    %p289 = pnand %p287, %p288
    %p290 = pneg %p289
    // Predicated region
    $region9: #{autoencoder_forward.1} parent=5 // pred_check
      _
    $region10: #{autoencoder_forward.1} parent=5 // pred_check_branch
      %292 = sbr.rel (%p289) target = $region12
    $region11: #{autoencoder_forward.1} parent=5 // pred_region
      %s293 = ssub.s32 %s17, 1
      // Predicated region
      $region13: #{autoencoder_forward.1} parent=11 // pred_check
        %p294 = pneg %p64
      $region14: #{autoencoder_forward.1} parent=11 // pred_check_branch
        %296 = sbr.rel (%p294) target = $region16
      $region15: #{autoencoder_forward.1} parent=11 // pred_region
        _
      $region16: #{autoencoder_forward.1} parent=11 // pred_fallthru
        _
      // Predicated region
      $region17: #{autoencoder_forward.1} parent=11 // pred_check
        %p297 = pneg %p85
      $region18: #{autoencoder_forward.1} parent=11 // pred_check_branch
        %299 = sbr.rel (%p297) target = $region20
      $region19: #{autoencoder_forward.1} parent=11 // pred_region
        _
      $region20: #{autoencoder_forward.1} parent=11 // pred_fallthru
        _
      // Predicated region
      $region21: #{autoencoder_forward.1} parent=11 // pred_check
        %p300 = pneg %p106
      $region22: #{autoencoder_forward.1} parent=11 // pred_check_branch
        %302 = sbr.rel (%p300) target = $region24
      $region23: #{autoencoder_forward.1} parent=11 // pred_region
        _
      $region24: #{autoencoder_forward.1} parent=11 // pred_fallthru
        _
      // Predicated region
      $region25: #{autoencoder_forward.1} parent=11 // pred_check
        %p303 = pneg %p127
      $region26: #{autoencoder_forward.1} parent=11 // pred_check_branch
        %305 = sbr.rel (%p303) target = $region28
      $region27: #{autoencoder_forward.1} parent=11 // pred_region
        _
      $region28: #{autoencoder_forward.1} parent=11 // pred_fallthru
        _
      // Predicated region
      $region29: #{autoencoder_forward.1} parent=11 // pred_check
        %p306 = pneg %p148
      $region30: #{autoencoder_forward.1} parent=11 // pred_check_branch
        %308 = sbr.rel (%p306) target = $region32
      $region31: #{autoencoder_forward.1} parent=11 // pred_region
        _
      $region32: #{autoencoder_forward.1} parent=11 // pred_fallthru
        _
      // Predicated region
      $region33: #{autoencoder_forward.1} parent=11 // pred_check
        %p309 = pneg %p169
      $region34: #{autoencoder_forward.1} parent=11 // pred_check_branch
        %311 = sbr.rel (%p309) target = $region36
      $region35: #{autoencoder_forward.1} parent=11 // pred_region
        _
      $region36: #{autoencoder_forward.1} parent=11 // pred_fallthru
        _
      // Predicated region
      $region37: #{autoencoder_forward.1} parent=11 // pred_check
        %p312 = pneg %p190
      $region38: #{autoencoder_forward.1} parent=11 // pred_check_branch
        %314 = sbr.rel (%p312) target = $region40
      $region39: #{autoencoder_forward.1} parent=11 // pred_region
        _
      $region40: #{autoencoder_forward.1} parent=11 // pred_fallthru
        _
      // Predicated region
      $region41: #{autoencoder_forward.1} parent=11 // pred_check
        %p315 = pneg %p211
      $region42: #{autoencoder_forward.1} parent=11 // pred_check_branch
        %317 = sbr.rel (%p315) target = $region44
      $region43: #{autoencoder_forward.1} parent=11 // pred_region
        _
      $region44: #{autoencoder_forward.1} parent=11 // pred_fallthru
        _
      // Predicated region
      $region45: #{autoencoder_forward.1} parent=11 // pred_check
        %p318 = pneg %p232
      $region46: #{autoencoder_forward.1} parent=11 // pred_check_branch
        %320 = sbr.rel (%p318) target = $region48
      $region47: #{autoencoder_forward.1} parent=11 // pred_region
        _
      $region48: #{autoencoder_forward.1} parent=11 // pred_fallthru
        _
      // Predicated region
      $region49: #{autoencoder_forward.1} parent=11 // pred_check
        %p321 = pneg %p253
      $region50: #{autoencoder_forward.1} parent=11 // pred_check_branch
        %323 = sbr.rel (%p321) target = $region52
      $region51: #{autoencoder_forward.1} parent=11 // pred_region
        _
      $region52: #{autoencoder_forward.1} parent=11 // pred_fallthru
        _
    $region12: #{autoencoder_forward.1} parent=5 // pred_fallthru
      _
    %p324 = scmp.lt.s32.totalorder %s17, 2
    // Predicated region
    $region53: #{autoencoder_forward.1} parent=5 // pred_check
      %p325 = pneg %p324
    $region54: #{autoencoder_forward.1} parent=5 // pred_check_branch
      %327 = sbr.rel (%p325) target = $region56
    $region55: #{autoencoder_forward.1} parent=5 // pred_region
      // Predicated region
      $region57: #{autoencoder_forward.1} parent=55 // pred_check
        %p328 = pneg %p37
      $region58: #{autoencoder_forward.1} parent=55 // pred_check_branch
        %330 = sbr.rel (%p328) target = $region60
      $region59: #{autoencoder_forward.1} parent=55 // pred_region
        %p331 = scmp.lt.s32.totalorder %s17, 1
        %s332 = scalar_select %p331, %s17, 1
        %s333 = smul.addr %s332, 2
        %s334 = scalar_lea.vmem %s0, %s333
      $region60: #{autoencoder_forward.1} parent=55 // pred_fallthru
        _
    $region56: #{autoencoder_forward.1} parent=5 // pred_fallthru
      _
    %p335 = scmp.le.s32.totalorder 1, %s17
    %p336 = scmp.lt.s32.totalorder %s17, 3
    %p337 = pnand %p335, %p336
    %p338 = pneg %p337
    // Predicated region
    $region61: #{autoencoder_forward.1} parent=5 // pred_check
      _
    $region62: #{autoencoder_forward.1} parent=5 // pred_check_branch
      %340 = sbr.rel (%p337) target = $region64
    $region63: #{autoencoder_forward.1} parent=5 // pred_region
      %s341 = ssub.s32 %s17, 1
      %p342 = scmp.lt.s32.totalorder %s22, 1
      %s343 = scalar_select %p342, %s22, 1
      %s344 = smul.addr %s343, 2
      %s345 = scalar_lea.vmem %s0, %s344
      %p346 = pneg %p43
      %p347 = pneg %p40
      %p348 = pneg %p64
      %p349 = pneg %p61
      %p350 = pneg %p85
      %p351 = pneg %p82
      %p352 = pneg %p106
      %p353 = pneg %p103
      %p354 = pneg %p127
      %p355 = pneg %p124
      %p356 = pneg %p148
      %p357 = pneg %p145
      %p358 = pneg %p169
      %p359 = pneg %p166
      %p360 = pneg %p190
      %p361 = pneg %p187
      %p362 = pneg %p211
      %p363 = pneg %p208
      %p364 = pneg %p232
      %p365 = pneg %p229
      %p366 = pneg %p253
      %p367 = pneg %p250
      %p368 = pneg %p279
      %p369 = pneg %p276
      %p370 = scmp.lt.s32.totalorder %s22, 1
      %s371 = scalar_select %p370, %s22, 1
      %s372 = smul.addr %s371, 2
      %s373 = scalar_lea.vmem %s11, %s372
      %p374 = scmp.lt.s32.totalorder %s22, 1
      %s375 = scalar_select %p374, %s22, 1
      %s376 = smul.addr %s375, 2
      %s377 = scalar_lea.vmem %s0, %s376
      %p378 = scmp.lt.s32.totalorder %s22, 1
      %s379 = scalar_select %p378, %s22, 1
      %s380 = smul.addr %s379, 2
      %s381 = scalar_lea.vmem %s11, %s380
      %v382 = vld [vmem:[%s377] sm:$0x3]
      %v383 = vld [vmem:[%s1] sm:$0xff]
      %v384 = vld [vmem:[%s1 + $0x8] sm:$0xff]
      %v385 = vld [vmem:[%s1 + $0x10] sm:$0xff]
      %v386 = vld [vmem:[%s1 + $0x18] sm:$0xff]
      %v387 = vld [vmem:[%s1 + $0x20] sm:$0xff]
      %v388 = vld [vmem:[%s1 + $0x28] sm:$0xff]
      %v389 = vld [vmem:[%s1 + $0x30] sm:$0xff]
      %v390 = vld [vmem:[%s1 + $0x38] sm:$0xff]
      %v391 = vld [vmem:[%s1 + $0x40] sm:$0xff]
      %v392 = vld [vmem:[%s1 + $0x48] sm:$0xff]
      %v393 = vld [vmem:[%s1 + $0x50] sm:$0xff]
      %v394 = vld [vmem:[%s1 + $0x58] sm:$0xff]
      %v395 = vld [vmem:[%s1 + $0x60] sm:$0xff]
      %v396 = vld [vmem:[%s1 + $0x68] sm:$0xff]
      %v397 = vld [vmem:[%s1 + $0x70] sm:$0xff]
      %v398 = vld [vmem:[%s1 + $0x78] sm:$0xff]
      %v399 = vld [vmem:[%s1 + $0x80] sm:$0xff]
      %v400 = vld [vmem:[%s1 + $0x88] sm:$0xff]
      %v401 = vld [vmem:[%s1 + $0x90] sm:$0xff]
      %v402 = vld [vmem:[%s1 + $0x98] sm:$0xff]
      %v403 = vld [vmem:[%s1 + $0xa0] sm:$0xff]
      %v404 = vld [vmem:[%s1 + $0xa8] sm:$0xff]
      %v405 = vld [vmem:[%s1 + $0xb0] sm:$0xff]
      %v406 = vld [vmem:[%s1 + $0xb8] sm:$0xff]
      %v407 = vld [vmem:[%s1 + $0xc0] sm:$0xff]
      %v408 = vld [vmem:[%s1 + $0xc8] sm:$0xff]
      %v409 = vld [vmem:[%s1 + $0xd0] sm:$0xff]
      %v410 = vld [vmem:[%s1 + $0xd8] sm:$0xff]
      %v411 = vld [vmem:[%s1 + $0xe0] sm:$0xff]
      %v412 = vld [vmem:[%s1 + $0xe8] sm:$0xff]
      %v413 = vld [vmem:[%s1 + $0xf0] sm:$0xff]
      %v414 = vld [vmem:[%s1 + $0xf8] sm:$0xff]
      %v415 = vld [vmem:[%s1 + $0x100] sm:$0xff]
      %v416 = vld [vmem:[%s1 + $0x108] sm:$0xff]
      %v417 = vld [vmem:[%s1 + $0x110] sm:$0xff]
      %v418 = vld [vmem:[%s1 + $0x118] sm:$0xff]
      %v419 = vld [vmem:[%s1 + $0x120] sm:$0xff]
      %v420 = vld [vmem:[%s1 + $0x128] sm:$0xff]
      %v421 = vld [vmem:[%s1 + $0x130] sm:$0xff]
      %v422 = vld [vmem:[%s1 + $0x138] sm:$0xff]
      %v423 = vld [vmem:[%s1 + $0x140] sm:$0xff]
      %v424 = vld [vmem:[%s1 + $0x148] sm:$0xff]
      %v425 = vld [vmem:[%s1 + $0x150] sm:$0xff]
      %v426 = vld [vmem:[%s1 + $0x158] sm:$0xff]
      %v427 = vld [vmem:[%s1 + $0x160] sm:$0xff]
      %v428 = vld [vmem:[%s1 + $0x168] sm:$0xff]
      %v429 = vld [vmem:[%s1 + $0x170] sm:$0xff]
      %v430 = vld [vmem:[%s1 + $0x178] sm:$0xff]
      %v431 = vld [vmem:[%s1 + $0x180] sm:$0xff]
      %v432 = vld [vmem:[%s1 + $0x188] sm:$0xff]
      %v433 = vld [vmem:[%s1 + $0x190] sm:$0xff]
      %v434 = vld [vmem:[%s1 + $0x198] sm:$0xff]
      %v435 = vld [vmem:[%s1 + $0x1a0] sm:$0xff]
      %v436 = vld [vmem:[%s1 + $0x1a8] sm:$0xff]
      %v437 = vld [vmem:[%s1 + $0x1b0] sm:$0xff]
      %v438 = vld [vmem:[%s1 + $0x1b8] sm:$0xff]
      %v439 = vld [vmem:[%s1 + $0x1c0] sm:$0xff]
      %v440 = vld [vmem:[%s1 + $0x1c8] sm:$0xff]
      %v441 = vld [vmem:[%s1 + $0x1d0] sm:$0xff]
      %v442 = vld [vmem:[%s1 + $0x1d8] sm:$0xff]
      %v443 = vld [vmem:[%s1 + $0x1e0] sm:$0xff]
      %v444 = vld [vmem:[%s1 + $0x1e8] sm:$0xff]
      %v445 = vld [vmem:[%s1 + $0x1f0] sm:$0xff]
      %v446 = vld [vmem:[%s1 + $0x1f8] sm:$0xff]
      %v448 = vlaneseq
      %v449 = vshrl.u32 %v448, 7
      %v450 = vsub.s32 0, %v449
      %v451 = vrot.slane %v382, %v450
      %v452 = vlaneseq
      %v453 = vshrl.u32 %v452, 7
      %v454 = vsub.s32 1, %v453
      %v455 = vrot.slane %v382, %v454
      %458 = vmatprep.subr.mxu0 %v414
      %459 = vmatpush1.msra.mxu0 %v413
      %460 = vmatprep.subr.mxu0 %v412
      %461 = vmatpush1.msra.mxu0 %v411
      %462 = vmatprep.subr.mxu0 %v410
      %463 = vmatpush1.msra.mxu0 %v409
      %464 = vmatprep.subr.mxu0 %v408
      %465 = vmatpush1.msra.mxu0 %v407
      %466 = vmatprep.subr.mxu0 %v406
      %467 = vmatpush1.msra.mxu0 %v405
      %468 = vmatprep.subr.mxu0 %v404
      %469 = vmatpush1.msra.mxu0 %v403
      %470 = vmatprep.subr.mxu0 %v402
      %471 = vmatpush1.msra.mxu0 %v401
      %472 = vmatprep.subr.mxu0 %v400
      %473 = vmatpush1.msra.mxu0 %v399
      %474 = vmatprep.subr.mxu0 %v398
      %475 = vmatpush1.msra.mxu0 %v397
      %476 = vmatprep.subr.mxu0 %v396
      %477 = vmatpush1.msra.mxu0 %v395
      %478 = vmatprep.subr.mxu0 %v394
      %479 = vmatpush1.msra.mxu0 %v393
      %480 = vmatprep.subr.mxu0 %v392
      %481 = vmatpush1.msra.mxu0 %v391
      %482 = vmatprep.subr.mxu0 %v390
      %483 = vmatpush1.msra.mxu0 %v389
      %484 = vmatprep.subr.mxu0 %v388
      %485 = vmatpush1.msra.mxu0 %v387
      %486 = vmatprep.subr.mxu0 %v386
      %487 = vmatpush1.msra.mxu0 %v385
      %488 = vmatprep.subr.mxu0 %v384
      %489 = vmatpush1.msra.mxu0 %v383
      %490 = vmatprep.subr.mxu0 %v446
      %491 = vmatpush2.msra.mxu0 %v445
      %492 = vmatprep.subr.mxu0 %v444
      %493 = vmatpush2.msra.mxu0 %v443
      %494 = vmatprep.subr.mxu0 %v442
      %495 = vmatpush2.msra.mxu0 %v441
      %496 = vmatprep.subr.mxu0 %v440
      %497 = vmatpush2.msra.mxu0 %v439
      %498 = vmatprep.subr.mxu0 %v438
      %499 = vmatpush2.msra.mxu0 %v437
      %500 = vmatprep.subr.mxu0 %v436
      %501 = vmatpush2.msra.mxu0 %v435
      %502 = vmatprep.subr.mxu0 %v434
      %503 = vmatpush2.msra.mxu0 %v433
      %504 = vmatprep.subr.mxu0 %v432
      %505 = vmatpush2.msra.mxu0 %v431
      %506 = vmatprep.subr.mxu0 %v430
      %507 = vmatpush2.msra.mxu0 %v429
      %508 = vmatprep.subr.mxu0 %v428
      %509 = vmatpush2.msra.mxu0 %v427
      %510 = vmatprep.subr.mxu0 %v426
      %511 = vmatpush2.msra.mxu0 %v425
      %512 = vmatprep.subr.mxu0 %v424
      %513 = vmatpush2.msra.mxu0 %v423
      %514 = vmatprep.subr.mxu0 %v422
      %515 = vmatpush2.msra.mxu0 %v421
      %516 = vmatprep.subr.mxu0 %v420
      %517 = vmatpush2.msra.mxu0 %v419
      %518 = vmatprep.subr.mxu0 %v418
      %519 = vmatpush2.msra.mxu0 %v417
      %520 = vmatprep.subr.mxu0 %v416
      %521 = vmatpush2.msra.mxu0 %v415
      %522 = vmatprep.mubr.f32.mxu0 %v455
      %523 = vmatmul.mubr.f32.gmra.mxu0 %v451
      %v524 = vpop.f32.mrf.mxu0
      %v525 = vadd.f32 0.0, %v524
      %v526 = vpop.f32.mrf.mxu0
      %v527 = vadd.f32 0.0, %v526
      %528 = vdwg.mxu0
      %s529 = scalar_lea.vmem %s1, 512
      %v530 = vld [vmem:[%s529] sm:$0xff]
      %v531 = vld [vmem:[%s529 + $0x8] sm:$0xff]
      %v532 = vld [vmem:[%s529 + $0x10] sm:$0xff]
      %v533 = vld [vmem:[%s529 + $0x18] sm:$0xff]
      %v534 = vld [vmem:[%s529 + $0x20] sm:$0xff]
      %v535 = vld [vmem:[%s529 + $0x28] sm:$0xff]
      %v536 = vld [vmem:[%s529 + $0x30] sm:$0xff]
      %v537 = vld [vmem:[%s529 + $0x38] sm:$0xff]
      %v538 = vld [vmem:[%s529 + $0x40] sm:$0xff]
      %v539 = vld [vmem:[%s529 + $0x48] sm:$0xff]
      %v540 = vld [vmem:[%s529 + $0x50] sm:$0xff]
      %v541 = vld [vmem:[%s529 + $0x58] sm:$0xff]
      %v542 = vld [vmem:[%s529 + $0x60] sm:$0xff]
      %v543 = vld [vmem:[%s529 + $0x68] sm:$0xff]
      %v544 = vld [vmem:[%s529 + $0x70] sm:$0xff]
      %v545 = vld [vmem:[%s529 + $0x78] sm:$0xff]
      %v546 = vld [vmem:[%s529 + $0x80] sm:$0xff]
      %v547 = vld [vmem:[%s529 + $0x88] sm:$0xff]
      %v548 = vld [vmem:[%s529 + $0x90] sm:$0xff]
      %v549 = vld [vmem:[%s529 + $0x98] sm:$0xff]
      %v550 = vld [vmem:[%s529 + $0xa0] sm:$0xff]
      %v551 = vld [vmem:[%s529 + $0xa8] sm:$0xff]
      %v552 = vld [vmem:[%s529 + $0xb0] sm:$0xff]
      %v553 = vld [vmem:[%s529 + $0xb8] sm:$0xff]
      %v554 = vld [vmem:[%s529 + $0xc0] sm:$0xff]
      %v555 = vld [vmem:[%s529 + $0xc8] sm:$0xff]
      %v556 = vld [vmem:[%s529 + $0xd0] sm:$0xff]
      %v557 = vld [vmem:[%s529 + $0xd8] sm:$0xff]
      %v558 = vld [vmem:[%s529 + $0xe0] sm:$0xff]
      %v559 = vld [vmem:[%s529 + $0xe8] sm:$0xff]
      %v560 = vld [vmem:[%s529 + $0xf0] sm:$0xff]
      %v561 = vld [vmem:[%s529 + $0xf8] sm:$0xff]
      %v562 = vld [vmem:[%s529 + $0x100] sm:$0xff]
      %v563 = vld [vmem:[%s529 + $0x108] sm:$0xff]
      %v564 = vld [vmem:[%s529 + $0x110] sm:$0xff]
      %v565 = vld [vmem:[%s529 + $0x118] sm:$0xff]
      %v566 = vld [vmem:[%s529 + $0x120] sm:$0xff]
      %v567 = vld [vmem:[%s529 + $0x128] sm:$0xff]
      %v568 = vld [vmem:[%s529 + $0x130] sm:$0xff]
      %v569 = vld [vmem:[%s529 + $0x138] sm:$0xff]
      %v570 = vld [vmem:[%s529 + $0x140] sm:$0xff]
      %v571 = vld [vmem:[%s529 + $0x148] sm:$0xff]
      %v572 = vld [vmem:[%s529 + $0x150] sm:$0xff]
      %v573 = vld [vmem:[%s529 + $0x158] sm:$0xff]
      %v574 = vld [vmem:[%s529 + $0x160] sm:$0xff]
      %v575 = vld [vmem:[%s529 + $0x168] sm:$0xff]
      %v576 = vld [vmem:[%s529 + $0x170] sm:$0xff]
      %v577 = vld [vmem:[%s529 + $0x178] sm:$0xff]
      %v578 = vld [vmem:[%s529 + $0x180] sm:$0xff]
      %v579 = vld [vmem:[%s529 + $0x188] sm:$0xff]
      %v580 = vld [vmem:[%s529 + $0x190] sm:$0xff]
      %v581 = vld [vmem:[%s529 + $0x198] sm:$0xff]
      %v582 = vld [vmem:[%s529 + $0x1a0] sm:$0xff]
      %v583 = vld [vmem:[%s529 + $0x1a8] sm:$0xff]
      %v584 = vld [vmem:[%s529 + $0x1b0] sm:$0xff]
      %v585 = vld [vmem:[%s529 + $0x1b8] sm:$0xff]
      %v586 = vld [vmem:[%s529 + $0x1c0] sm:$0xff]
      %v587 = vld [vmem:[%s529 + $0x1c8] sm:$0xff]
      %v588 = vld [vmem:[%s529 + $0x1d0] sm:$0xff]
      %v589 = vld [vmem:[%s529 + $0x1d8] sm:$0xff]
      %v590 = vld [vmem:[%s529 + $0x1e0] sm:$0xff]
      %v591 = vld [vmem:[%s529 + $0x1e8] sm:$0xff]
      %v592 = vld [vmem:[%s529 + $0x1f0] sm:$0xff]
      %v593 = vld [vmem:[%s529 + $0x1f8] sm:$0xff]
      %594 = vmatprep.subr.mxu0 %v561
      %595 = vmatpush1.msra.mxu0 %v560
      %596 = vmatprep.subr.mxu0 %v559
      %597 = vmatpush1.msra.mxu0 %v558
      %598 = vmatprep.subr.mxu0 %v557
      %599 = vmatpush1.msra.mxu0 %v556
      %600 = vmatprep.subr.mxu0 %v555
      %601 = vmatpush1.msra.mxu0 %v554
      %602 = vmatprep.subr.mxu0 %v553
      %603 = vmatpush1.msra.mxu0 %v552
      %604 = vmatprep.subr.mxu0 %v551
      %605 = vmatpush1.msra.mxu0 %v550
      %606 = vmatprep.subr.mxu0 %v549
      %607 = vmatpush1.msra.mxu0 %v548
      %608 = vmatprep.subr.mxu0 %v547
      %609 = vmatpush1.msra.mxu0 %v546
      %610 = vmatprep.subr.mxu0 %v545
      %611 = vmatpush1.msra.mxu0 %v544
      %612 = vmatprep.subr.mxu0 %v543
      %613 = vmatpush1.msra.mxu0 %v542
      %614 = vmatprep.subr.mxu0 %v541
      %615 = vmatpush1.msra.mxu0 %v540
      %616 = vmatprep.subr.mxu0 %v539
      %617 = vmatpush1.msra.mxu0 %v538
      %618 = vmatprep.subr.mxu0 %v537
      %619 = vmatpush1.msra.mxu0 %v536
      %620 = vmatprep.subr.mxu0 %v535
      %621 = vmatpush1.msra.mxu0 %v534
      %622 = vmatprep.subr.mxu0 %v533
      %623 = vmatpush1.msra.mxu0 %v532
      %624 = vmatprep.subr.mxu0 %v531
      %625 = vmatpush1.msra.mxu0 %v530
      %626 = vmatprep.subr.mxu0 %v593
      %627 = vmatpush2.msra.mxu0 %v592
      %628 = vmatprep.subr.mxu0 %v591
      %629 = vmatpush2.msra.mxu0 %v590
      %630 = vmatprep.subr.mxu0 %v589
      %631 = vmatpush2.msra.mxu0 %v588
      %632 = vmatprep.subr.mxu0 %v587
      %633 = vmatpush2.msra.mxu0 %v586
      %634 = vmatprep.subr.mxu0 %v585
      %635 = vmatpush2.msra.mxu0 %v584
      %636 = vmatprep.subr.mxu0 %v583
      %637 = vmatpush2.msra.mxu0 %v582
      %638 = vmatprep.subr.mxu0 %v581
      %639 = vmatpush2.msra.mxu0 %v580
      %640 = vmatprep.subr.mxu0 %v579
      %641 = vmatpush2.msra.mxu0 %v578
      %642 = vmatprep.subr.mxu0 %v577
      %643 = vmatpush2.msra.mxu0 %v576
      %644 = vmatprep.subr.mxu0 %v575
      %645 = vmatpush2.msra.mxu0 %v574
      %646 = vmatprep.subr.mxu0 %v573
      %647 = vmatpush2.msra.mxu0 %v572
      %648 = vmatprep.subr.mxu0 %v571
      %649 = vmatpush2.msra.mxu0 %v570
      %650 = vmatprep.subr.mxu0 %v569
      %651 = vmatpush2.msra.mxu0 %v568
      %652 = vmatprep.subr.mxu0 %v567
      %653 = vmatpush2.msra.mxu0 %v566
      %654 = vmatprep.subr.mxu0 %v565
      %655 = vmatpush2.msra.mxu0 %v564
      %656 = vmatprep.subr.mxu0 %v563
      %657 = vmatpush2.msra.mxu0 %v562
      %658 = vmatprep.mubr.f32.mxu0 %v455
      %659 = vmatmul.mubr.f32.gmra.mxu0 %v451
      %v660 = vpop.f32.mrf.mxu0
      %v661 = vadd.f32 0.0, %v660
      %v662 = vpop.f32.mrf.mxu0
      %v663 = vadd.f32 0.0, %v662
      %664 = vdwg.mxu0
      %v665 = vmax.f32 %v525, %v661
      %v666 = vmax.f32 %v527, %v663
      %s667 = scalar_lea.vmem %s1, 1024
      %v668 = vld [vmem:[%s667] sm:$0xff]
      %v669 = vld [vmem:[%s667 + $0x8] sm:$0xff]
      %v670 = vld [vmem:[%s667 + $0x10] sm:$0xff]
      %v671 = vld [vmem:[%s667 + $0x18] sm:$0xff]
      %v672 = vld [vmem:[%s667 + $0x20] sm:$0xff]
      %v673 = vld [vmem:[%s667 + $0x28] sm:$0xff]
      %v674 = vld [vmem:[%s667 + $0x30] sm:$0xff]
      %v675 = vld [vmem:[%s667 + $0x38] sm:$0xff]
      %v676 = vld [vmem:[%s667 + $0x40] sm:$0xff]
      %v677 = vld [vmem:[%s667 + $0x48] sm:$0xff]
      %v678 = vld [vmem:[%s667 + $0x50] sm:$0xff]
      %v679 = vld [vmem:[%s667 + $0x58] sm:$0xff]
      %v680 = vld [vmem:[%s667 + $0x60] sm:$0xff]
      %v681 = vld [vmem:[%s667 + $0x68] sm:$0xff]
      %v682 = vld [vmem:[%s667 + $0x70] sm:$0xff]
      %v683 = vld [vmem:[%s667 + $0x78] sm:$0xff]
      %v684 = vld [vmem:[%s667 + $0x80] sm:$0xff]
      %v685 = vld [vmem:[%s667 + $0x88] sm:$0xff]
      %v686 = vld [vmem:[%s667 + $0x90] sm:$0xff]
      %v687 = vld [vmem:[%s667 + $0x98] sm:$0xff]
      %v688 = vld [vmem:[%s667 + $0xa0] sm:$0xff]
      %v689 = vld [vmem:[%s667 + $0xa8] sm:$0xff]
      %v690 = vld [vmem:[%s667 + $0xb0] sm:$0xff]
      %v691 = vld [vmem:[%s667 + $0xb8] sm:$0xff]
      %v692 = vld [vmem:[%s667 + $0xc0] sm:$0xff]
      %v693 = vld [vmem:[%s667 + $0xc8] sm:$0xff]
      %v694 = vld [vmem:[%s667 + $0xd0] sm:$0xff]
      %v695 = vld [vmem:[%s667 + $0xd8] sm:$0xff]
      %v696 = vld [vmem:[%s667 + $0xe0] sm:$0xff]
      %v697 = vld [vmem:[%s667 + $0xe8] sm:$0xff]
      %v698 = vld [vmem:[%s667 + $0xf0] sm:$0xff]
      %v699 = vld [vmem:[%s667 + $0xf8] sm:$0xff]
      %v700 = vld [vmem:[%s667 + $0x100] sm:$0xff]
      %v701 = vld [vmem:[%s667 + $0x108] sm:$0xff]
      %v702 = vld [vmem:[%s667 + $0x110] sm:$0xff]
      %v703 = vld [vmem:[%s667 + $0x118] sm:$0xff]
      %v704 = vld [vmem:[%s667 + $0x120] sm:$0xff]
      %v705 = vld [vmem:[%s667 + $0x128] sm:$0xff]
      %v706 = vld [vmem:[%s667 + $0x130] sm:$0xff]
      %v707 = vld [vmem:[%s667 + $0x138] sm:$0xff]
      %v708 = vld [vmem:[%s667 + $0x140] sm:$0xff]
      %v709 = vld [vmem:[%s667 + $0x148] sm:$0xff]
      %v710 = vld [vmem:[%s667 + $0x150] sm:$0xff]
      %v711 = vld [vmem:[%s667 + $0x158] sm:$0xff]
      %v712 = vld [vmem:[%s667 + $0x160] sm:$0xff]
      %v713 = vld [vmem:[%s667 + $0x168] sm:$0xff]
      %v714 = vld [vmem:[%s667 + $0x170] sm:$0xff]
      %v715 = vld [vmem:[%s667 + $0x178] sm:$0xff]
      %v716 = vld [vmem:[%s667 + $0x180] sm:$0xff]
      %v717 = vld [vmem:[%s667 + $0x188] sm:$0xff]
      %v718 = vld [vmem:[%s667 + $0x190] sm:$0xff]
      %v719 = vld [vmem:[%s667 + $0x198] sm:$0xff]
      %v720 = vld [vmem:[%s667 + $0x1a0] sm:$0xff]
      %v721 = vld [vmem:[%s667 + $0x1a8] sm:$0xff]
      %v722 = vld [vmem:[%s667 + $0x1b0] sm:$0xff]
      %v723 = vld [vmem:[%s667 + $0x1b8] sm:$0xff]
      %v724 = vld [vmem:[%s667 + $0x1c0] sm:$0xff]
      %v725 = vld [vmem:[%s667 + $0x1c8] sm:$0xff]
      %v726 = vld [vmem:[%s667 + $0x1d0] sm:$0xff]
      %v727 = vld [vmem:[%s667 + $0x1d8] sm:$0xff]
      %v728 = vld [vmem:[%s667 + $0x1e0] sm:$0xff]
      %v729 = vld [vmem:[%s667 + $0x1e8] sm:$0xff]
      %v730 = vld [vmem:[%s667 + $0x1f0] sm:$0xff]
      %v731 = vld [vmem:[%s667 + $0x1f8] sm:$0xff]
      %732 = vmatprep.subr.mxu0 %v699
      %733 = vmatpush1.msra.mxu0 %v698
      %734 = vmatprep.subr.mxu0 %v697
      %735 = vmatpush1.msra.mxu0 %v696
      %736 = vmatprep.subr.mxu0 %v695
      %737 = vmatpush1.msra.mxu0 %v694
      %738 = vmatprep.subr.mxu0 %v693
      %739 = vmatpush1.msra.mxu0 %v692
      %740 = vmatprep.subr.mxu0 %v691
      %741 = vmatpush1.msra.mxu0 %v690
      %742 = vmatprep.subr.mxu0 %v689
      %743 = vmatpush1.msra.mxu0 %v688
      %744 = vmatprep.subr.mxu0 %v687
      %745 = vmatpush1.msra.mxu0 %v686
      %746 = vmatprep.subr.mxu0 %v685
      %747 = vmatpush1.msra.mxu0 %v684
      %748 = vmatprep.subr.mxu0 %v683
      %749 = vmatpush1.msra.mxu0 %v682
      %750 = vmatprep.subr.mxu0 %v681
      %751 = vmatpush1.msra.mxu0 %v680
      %752 = vmatprep.subr.mxu0 %v679
      %753 = vmatpush1.msra.mxu0 %v678
      %754 = vmatprep.subr.mxu0 %v677
      %755 = vmatpush1.msra.mxu0 %v676
      %756 = vmatprep.subr.mxu0 %v675
      %757 = vmatpush1.msra.mxu0 %v674
      %758 = vmatprep.subr.mxu0 %v673
      %759 = vmatpush1.msra.mxu0 %v672
      %760 = vmatprep.subr.mxu0 %v671
      %761 = vmatpush1.msra.mxu0 %v670
      %762 = vmatprep.subr.mxu0 %v669
      %763 = vmatpush1.msra.mxu0 %v668
      %764 = vmatprep.subr.mxu0 %v731
      %765 = vmatpush2.msra.mxu0 %v730
      %766 = vmatprep.subr.mxu0 %v729
      %767 = vmatpush2.msra.mxu0 %v728
      %768 = vmatprep.subr.mxu0 %v727
      %769 = vmatpush2.msra.mxu0 %v726
      %770 = vmatprep.subr.mxu0 %v725
      %771 = vmatpush2.msra.mxu0 %v724
      %772 = vmatprep.subr.mxu0 %v723
      %773 = vmatpush2.msra.mxu0 %v722
      %774 = vmatprep.subr.mxu0 %v721
      %775 = vmatpush2.msra.mxu0 %v720
      %776 = vmatprep.subr.mxu0 %v719
      %777 = vmatpush2.msra.mxu0 %v718
      %778 = vmatprep.subr.mxu0 %v717
      %779 = vmatpush2.msra.mxu0 %v716
      %780 = vmatprep.subr.mxu0 %v715
      %781 = vmatpush2.msra.mxu0 %v714
      %782 = vmatprep.subr.mxu0 %v713
      %783 = vmatpush2.msra.mxu0 %v712
      %784 = vmatprep.subr.mxu0 %v711
      %785 = vmatpush2.msra.mxu0 %v710
      %786 = vmatprep.subr.mxu0 %v709
      %787 = vmatpush2.msra.mxu0 %v708
      %788 = vmatprep.subr.mxu0 %v707
      %789 = vmatpush2.msra.mxu0 %v706
      %790 = vmatprep.subr.mxu0 %v705
      %791 = vmatpush2.msra.mxu0 %v704
      %792 = vmatprep.subr.mxu0 %v703
      %793 = vmatpush2.msra.mxu0 %v702
      %794 = vmatprep.subr.mxu0 %v701
      %795 = vmatpush2.msra.mxu0 %v700
      %796 = vmatprep.mubr.f32.mxu0 %v455
      %797 = vmatmul.mubr.f32.gmra.mxu0 %v451
      %v798 = vpop.f32.mrf.mxu0
      %v799 = vadd.f32 0.0, %v798
      %v800 = vpop.f32.mrf.mxu0
      %v801 = vadd.f32 0.0, %v800
      %802 = vdwg.mxu0
      %v803 = vmax.f32 %v665, %v799
      %v804 = vmax.f32 %v666, %v801
      %s805 = scalar_lea.vmem %s1, 1536
      %v806 = vld [vmem:[%s805] sm:$0xff]
      %v807 = vld [vmem:[%s805 + $0x8] sm:$0xff]
      %v808 = vld [vmem:[%s805 + $0x10] sm:$0xff]
      %v809 = vld [vmem:[%s805 + $0x18] sm:$0xff]
      %v810 = vld [vmem:[%s805 + $0x20] sm:$0xff]
      %v811 = vld [vmem:[%s805 + $0x28] sm:$0xff]
      %v812 = vld [vmem:[%s805 + $0x30] sm:$0xff]
      %v813 = vld [vmem:[%s805 + $0x38] sm:$0xff]
      %v814 = vld [vmem:[%s805 + $0x40] sm:$0xff]
      %v815 = vld [vmem:[%s805 + $0x48] sm:$0xff]
      %v816 = vld [vmem:[%s805 + $0x50] sm:$0xff]
      %v817 = vld [vmem:[%s805 + $0x58] sm:$0xff]
      %v818 = vld [vmem:[%s805 + $0x60] sm:$0xff]
      %v819 = vld [vmem:[%s805 + $0x68] sm:$0xff]
      %v820 = vld [vmem:[%s805 + $0x70] sm:$0xff]
      %v821 = vld [vmem:[%s805 + $0x78] sm:$0xff]
      %v822 = vld [vmem:[%s805 + $0x80] sm:$0xff]
      %v823 = vld [vmem:[%s805 + $0x88] sm:$0xff]
      %v824 = vld [vmem:[%s805 + $0x90] sm:$0xff]
      %v825 = vld [vmem:[%s805 + $0x98] sm:$0xff]
      %v826 = vld [vmem:[%s805 + $0xa0] sm:$0xff]
      %v827 = vld [vmem:[%s805 + $0xa8] sm:$0xff]
      %v828 = vld [vmem:[%s805 + $0xb0] sm:$0xff]
      %v829 = vld [vmem:[%s805 + $0xb8] sm:$0xff]
      %v830 = vld [vmem:[%s805 + $0xc0] sm:$0xff]
      %v831 = vld [vmem:[%s805 + $0xc8] sm:$0xff]
      %v832 = vld [vmem:[%s805 + $0xd0] sm:$0xff]
      %v833 = vld [vmem:[%s805 + $0xd8] sm:$0xff]
      %v834 = vld [vmem:[%s805 + $0xe0] sm:$0xff]
      %v835 = vld [vmem:[%s805 + $0xe8] sm:$0xff]
      %v836 = vld [vmem:[%s805 + $0xf0] sm:$0xff]
      %v837 = vld [vmem:[%s805 + $0xf8] sm:$0xff]
      %v838 = vld [vmem:[%s805 + $0x100] sm:$0xff]
      %v839 = vld [vmem:[%s805 + $0x108] sm:$0xff]
      %v840 = vld [vmem:[%s805 + $0x110] sm:$0xff]
      %v841 = vld [vmem:[%s805 + $0x118] sm:$0xff]
      %v842 = vld [vmem:[%s805 + $0x120] sm:$0xff]
      %v843 = vld [vmem:[%s805 + $0x128] sm:$0xff]
      %v844 = vld [vmem:[%s805 + $0x130] sm:$0xff]
      %v845 = vld [vmem:[%s805 + $0x138] sm:$0xff]
      %v846 = vld [vmem:[%s805 + $0x140] sm:$0xff]
      %v847 = vld [vmem:[%s805 + $0x148] sm:$0xff]
      %v848 = vld [vmem:[%s805 + $0x150] sm:$0xff]
      %v849 = vld [vmem:[%s805 + $0x158] sm:$0xff]
      %v850 = vld [vmem:[%s805 + $0x160] sm:$0xff]
      %v851 = vld [vmem:[%s805 + $0x168] sm:$0xff]
      %v852 = vld [vmem:[%s805 + $0x170] sm:$0xff]
      %v853 = vld [vmem:[%s805 + $0x178] sm:$0xff]
      %v854 = vld [vmem:[%s805 + $0x180] sm:$0xff]
      %v855 = vld [vmem:[%s805 + $0x188] sm:$0xff]
      %v856 = vld [vmem:[%s805 + $0x190] sm:$0xff]
      %v857 = vld [vmem:[%s805 + $0x198] sm:$0xff]
      %v858 = vld [vmem:[%s805 + $0x1a0] sm:$0xff]
      %v859 = vld [vmem:[%s805 + $0x1a8] sm:$0xff]
      %v860 = vld [vmem:[%s805 + $0x1b0] sm:$0xff]
      %v861 = vld [vmem:[%s805 + $0x1b8] sm:$0xff]
      %v862 = vld [vmem:[%s805 + $0x1c0] sm:$0xff]
      %v863 = vld [vmem:[%s805 + $0x1c8] sm:$0xff]
      %v864 = vld [vmem:[%s805 + $0x1d0] sm:$0xff]
      %v865 = vld [vmem:[%s805 + $0x1d8] sm:$0xff]
      %v866 = vld [vmem:[%s805 + $0x1e0] sm:$0xff]
      %v867 = vld [vmem:[%s805 + $0x1e8] sm:$0xff]
      %v868 = vld [vmem:[%s805 + $0x1f0] sm:$0xff]
      %v869 = vld [vmem:[%s805 + $0x1f8] sm:$0xff]
      %870 = vmatprep.subr.mxu0 %v837
      %871 = vmatpush1.msra.mxu0 %v836
      %872 = vmatprep.subr.mxu0 %v835
      %873 = vmatpush1.msra.mxu0 %v834
      %874 = vmatprep.subr.mxu0 %v833
      %875 = vmatpush1.msra.mxu0 %v832
      %876 = vmatprep.subr.mxu0 %v831
      %877 = vmatpush1.msra.mxu0 %v830
      %878 = vmatprep.subr.mxu0 %v829
      %879 = vmatpush1.msra.mxu0 %v828
      %880 = vmatprep.subr.mxu0 %v827
      %881 = vmatpush1.msra.mxu0 %v826
      %882 = vmatprep.subr.mxu0 %v825
      %883 = vmatpush1.msra.mxu0 %v824
      %884 = vmatprep.subr.mxu0 %v823
      %885 = vmatpush1.msra.mxu0 %v822
      %886 = vmatprep.subr.mxu0 %v821
      %887 = vmatpush1.msra.mxu0 %v820
      %888 = vmatprep.subr.mxu0 %v819
      %889 = vmatpush1.msra.mxu0 %v818
      %890 = vmatprep.subr.mxu0 %v817
      %891 = vmatpush1.msra.mxu0 %v816
      %892 = vmatprep.subr.mxu0 %v815
      %893 = vmatpush1.msra.mxu0 %v814
      %894 = vmatprep.subr.mxu0 %v813
      %895 = vmatpush1.msra.mxu0 %v812
      %896 = vmatprep.subr.mxu0 %v811
      %897 = vmatpush1.msra.mxu0 %v810
      %898 = vmatprep.subr.mxu0 %v809
      %899 = vmatpush1.msra.mxu0 %v808
      %900 = vmatprep.subr.mxu0 %v807
      %901 = vmatpush1.msra.mxu0 %v806
      %902 = vmatprep.subr.mxu0 %v869
      %903 = vmatpush2.msra.mxu0 %v868
      %904 = vmatprep.subr.mxu0 %v867
      %905 = vmatpush2.msra.mxu0 %v866
      %906 = vmatprep.subr.mxu0 %v865
      %907 = vmatpush2.msra.mxu0 %v864
      %908 = vmatprep.subr.mxu0 %v863
      %909 = vmatpush2.msra.mxu0 %v862
      %910 = vmatprep.subr.mxu0 %v861
      %911 = vmatpush2.msra.mxu0 %v860
      %912 = vmatprep.subr.mxu0 %v859
      %913 = vmatpush2.msra.mxu0 %v858
      %914 = vmatprep.subr.mxu0 %v857
      %915 = vmatpush2.msra.mxu0 %v856
      %916 = vmatprep.subr.mxu0 %v855
      %917 = vmatpush2.msra.mxu0 %v854
      %918 = vmatprep.subr.mxu0 %v853
      %919 = vmatpush2.msra.mxu0 %v852
      %920 = vmatprep.subr.mxu0 %v851
      %921 = vmatpush2.msra.mxu0 %v850
      %922 = vmatprep.subr.mxu0 %v849
      %923 = vmatpush2.msra.mxu0 %v848
      %924 = vmatprep.subr.mxu0 %v847
      %925 = vmatpush2.msra.mxu0 %v846
      %926 = vmatprep.subr.mxu0 %v845
      %927 = vmatpush2.msra.mxu0 %v844
      %928 = vmatprep.subr.mxu0 %v843
      %929 = vmatpush2.msra.mxu0 %v842
      %930 = vmatprep.subr.mxu0 %v841
      %931 = vmatpush2.msra.mxu0 %v840
      %932 = vmatprep.subr.mxu0 %v839
      %933 = vmatpush2.msra.mxu0 %v838
      %934 = vmatprep.mubr.f32.mxu0 %v455
      %935 = vmatmul.mubr.f32.gmra.mxu0 %v451
      %v936 = vpop.f32.mrf.mxu0
      %v937 = vadd.f32 0.0, %v936
      %v938 = vpop.f32.mrf.mxu0
      %v939 = vadd.f32 0.0, %v938
      %940 = vdwg.mxu0
      %v941 = vmax.f32 %v803, %v937
      %v942 = vmax.f32 %v804, %v939
      %v943 = vld [vmem:[%s2] sm:$0x3]
      %v945 = vlaneseq
      %v946 = vshrl.u32 %v945, 7
      %v947 = vsub.s32 0, %v946
      %v948 = vrot.slane %v943, %v947
      %v949 = vlaneseq
      %v950 = vshrl.u32 %v949, 7
      %v951 = vsub.s32 1, %v950
      %v952 = vrot.slane %v943, %v951
      %v955 = vadd.f32 %v941, %v948
      %v956 = vadd.f32 %v942, %v952
      %v957 = vmax.f32 %v955, 0.0
      %v958 = vmax.f32 %v956, 0.0
      %v959 = vld [vmem:[%s3] sm:$0xff]
      %v960 = vld [vmem:[%s3 + $0x8] sm:$0xff]
      %v961 = vld [vmem:[%s3 + $0x10] sm:$0xff]
      %v962 = vld [vmem:[%s3 + $0x18] sm:$0xff]
      %v963 = vld [vmem:[%s3 + $0x20] sm:$0xff]
      %v964 = vld [vmem:[%s3 + $0x28] sm:$0xff]
      %v965 = vld [vmem:[%s3 + $0x30] sm:$0xff]
      %v966 = vld [vmem:[%s3 + $0x38] sm:$0xff]
      %v967 = vld [vmem:[%s3 + $0x40] sm:$0xff]
      %v968 = vld [vmem:[%s3 + $0x48] sm:$0xff]
      %v969 = vld [vmem:[%s3 + $0x50] sm:$0xff]
      %v970 = vld [vmem:[%s3 + $0x58] sm:$0xff]
      %v971 = vld [vmem:[%s3 + $0x60] sm:$0xff]
      %v972 = vld [vmem:[%s3 + $0x68] sm:$0xff]
      %v973 = vld [vmem:[%s3 + $0x70] sm:$0xff]
      %v974 = vld [vmem:[%s3 + $0x78] sm:$0xff]
      %v975 = vld [vmem:[%s3 + $0x80] sm:$0xff]
      %v976 = vld [vmem:[%s3 + $0x88] sm:$0xff]
      %vm977 = vcmask 130048
      %v979 = vsel %vm977, %v958, 0
      %981 = vmatprep.subr.mxu0 0.0
      %982 = vmatpush1.msra.mxu0 %v974
      %983 = vmatprep.subr.mxu0 0.0
      %984 = vmatpush1.msra.mxu0 %v973
      %985 = vmatprep.subr.mxu0 0.0
      %986 = vmatpush1.msra.mxu0 %v972
      %987 = vmatprep.subr.mxu0 0.0
      %988 = vmatpush1.msra.mxu0 %v971
      %989 = vmatprep.subr.mxu0 0.0
      %990 = vmatpush1.msra.mxu0 %v970
      %991 = vmatprep.subr.mxu0 0.0
      %992 = vmatpush1.msra.mxu0 %v969
      %993 = vmatprep.subr.mxu0 0.0
      %994 = vmatpush1.msra.mxu0 %v968
      %995 = vmatprep.subr.mxu0 0.0
      %996 = vmatpush1.msra.mxu0 %v967
      %997 = vmatprep.subr.mxu0 0.0
      %998 = vmatpush1.msra.mxu0 %v966
      %999 = vmatprep.subr.mxu0 0.0
      %1000 = vmatpush1.msra.mxu0 %v965
      %1001 = vmatprep.subr.mxu0 0.0
      %1002 = vmatpush1.msra.mxu0 %v964
      %1003 = vmatprep.subr.mxu0 0.0
      %1004 = vmatpush1.msra.mxu0 %v963
      %1005 = vmatprep.subr.mxu0 0.0
      %1006 = vmatpush1.msra.mxu0 %v962
      %1007 = vmatprep.subr.mxu0 0.0
      %1008 = vmatpush1.msra.mxu0 %v961
      %1009 = vmatprep.subr.mxu0 0.0
      %1010 = vmatpush1.msra.mxu0 %v960
      %1011 = vmatprep.subr.mxu0 0.0
      %1012 = vmatpush1.msra.mxu0 %v959
      %1013 = vmatprep.subr.mxu0 0.0
      %1014 = vmatpush2.msra.mxu0 0.0
      %1015 = vmatprep.subr.mxu0 0.0
      %1016 = vmatpush2.msra.mxu0 0.0
      %1017 = vmatprep.subr.mxu0 0.0
      %1018 = vmatpush2.msra.mxu0 0.0
      %1019 = vmatprep.subr.mxu0 0.0
      %1020 = vmatpush2.msra.mxu0 0.0
      %1021 = vmatprep.subr.mxu0 0.0
      %1022 = vmatpush2.msra.mxu0 0.0
      %1023 = vmatprep.subr.mxu0 0.0
      %1024 = vmatpush2.msra.mxu0 0.0
      %1025 = vmatprep.subr.mxu0 0.0
      %1026 = vmatpush2.msra.mxu0 0.0
      %1027 = vmatprep.subr.mxu0 0.0
      %1028 = vmatpush2.msra.mxu0 0.0
      %1029 = vmatprep.subr.mxu0 0.0
      %1030 = vmatpush2.msra.mxu0 0.0
      %1031 = vmatprep.subr.mxu0 0.0
      %1032 = vmatpush2.msra.mxu0 0.0
      %1033 = vmatprep.subr.mxu0 0.0
      %1034 = vmatpush2.msra.mxu0 0.0
      %1035 = vmatprep.subr.mxu0 0.0
      %1036 = vmatpush2.msra.mxu0 0.0
      %1037 = vmatprep.subr.mxu0 0.0
      %1038 = vmatpush2.msra.mxu0 0.0
      %1039 = vmatprep.subr.mxu0 0.0
      %1040 = vmatpush2.msra.mxu0 0.0
      %1041 = vmatprep.subr.mxu0 0.0
      %1042 = vmatpush2.msra.mxu0 %v976
      %1043 = vmatprep.subr.mxu0 0.0
      %1044 = vmatpush2.msra.mxu0 %v975
      %1045 = vmatprep.mubr.f32.mxu0 %v979
      %1046 = vmatmul.mubr.f32.gmra.mxu0 %v957
      %v1047 = vpop.f32.mrf.mxu0
      %v1048 = vadd.f32 0.0, %v1047
      %v1049 = vpop.f32.mrf.mxu0
      %1050 = vdwg.mxu0
      %s1051 = scalar_lea.vmem %s3, 144
      %v1052 = vld [vmem:[%s1051] sm:$0xff]
      %v1053 = vld [vmem:[%s1051 + $0x8] sm:$0xff]
      %v1054 = vld [vmem:[%s1051 + $0x10] sm:$0xff]
      %v1055 = vld [vmem:[%s1051 + $0x18] sm:$0xff]
      %v1056 = vld [vmem:[%s1051 + $0x20] sm:$0xff]
      %v1057 = vld [vmem:[%s1051 + $0x28] sm:$0xff]
      %v1058 = vld [vmem:[%s1051 + $0x30] sm:$0xff]
      %v1059 = vld [vmem:[%s1051 + $0x38] sm:$0xff]
      %v1060 = vld [vmem:[%s1051 + $0x40] sm:$0xff]
      %v1061 = vld [vmem:[%s1051 + $0x48] sm:$0xff]
      %v1062 = vld [vmem:[%s1051 + $0x50] sm:$0xff]
      %v1063 = vld [vmem:[%s1051 + $0x58] sm:$0xff]
      %v1064 = vld [vmem:[%s1051 + $0x60] sm:$0xff]
      %v1065 = vld [vmem:[%s1051 + $0x68] sm:$0xff]
      %v1066 = vld [vmem:[%s1051 + $0x70] sm:$0xff]
      %v1067 = vld [vmem:[%s1051 + $0x78] sm:$0xff]
      %v1068 = vld [vmem:[%s1051 + $0x80] sm:$0xff]
      %v1069 = vld [vmem:[%s1051 + $0x88] sm:$0xff]
      %1070 = vmatprep.subr.mxu0 0.0
      %1071 = vmatpush1.msra.mxu0 %v1067
      %1072 = vmatprep.subr.mxu0 0.0
      %1073 = vmatpush1.msra.mxu0 %v1066
      %1074 = vmatprep.subr.mxu0 0.0
      %1075 = vmatpush1.msra.mxu0 %v1065
      %1076 = vmatprep.subr.mxu0 0.0
      %1077 = vmatpush1.msra.mxu0 %v1064
      %1078 = vmatprep.subr.mxu0 0.0
      %1079 = vmatpush1.msra.mxu0 %v1063
      %1080 = vmatprep.subr.mxu0 0.0
      %1081 = vmatpush1.msra.mxu0 %v1062
      %1082 = vmatprep.subr.mxu0 0.0
      %1083 = vmatpush1.msra.mxu0 %v1061
      %1084 = vmatprep.subr.mxu0 0.0
      %1085 = vmatpush1.msra.mxu0 %v1060
      %1086 = vmatprep.subr.mxu0 0.0
      %1087 = vmatpush1.msra.mxu0 %v1059
      %1088 = vmatprep.subr.mxu0 0.0
      %1089 = vmatpush1.msra.mxu0 %v1058
      %1090 = vmatprep.subr.mxu0 0.0
      %1091 = vmatpush1.msra.mxu0 %v1057
      %1092 = vmatprep.subr.mxu0 0.0
      %1093 = vmatpush1.msra.mxu0 %v1056
      %1094 = vmatprep.subr.mxu0 0.0
      %1095 = vmatpush1.msra.mxu0 %v1055
      %1096 = vmatprep.subr.mxu0 0.0
      %1097 = vmatpush1.msra.mxu0 %v1054
      %1098 = vmatprep.subr.mxu0 0.0
      %1099 = vmatpush1.msra.mxu0 %v1053
      %1100 = vmatprep.subr.mxu0 0.0
      %1101 = vmatpush1.msra.mxu0 %v1052
      %1102 = vmatprep.subr.mxu0 0.0
      %1103 = vmatpush2.msra.mxu0 0.0
      %1104 = vmatprep.subr.mxu0 0.0
      %1105 = vmatpush2.msra.mxu0 0.0
      %1106 = vmatprep.subr.mxu0 0.0
      %1107 = vmatpush2.msra.mxu0 0.0
      %1108 = vmatprep.subr.mxu0 0.0
      %1109 = vmatpush2.msra.mxu0 0.0
      %1110 = vmatprep.subr.mxu0 0.0
      %1111 = vmatpush2.msra.mxu0 0.0
      %1112 = vmatprep.subr.mxu0 0.0
      %1113 = vmatpush2.msra.mxu0 0.0
      %1114 = vmatprep.subr.mxu0 0.0
      %1115 = vmatpush2.msra.mxu0 0.0
      %1116 = vmatprep.subr.mxu0 0.0
      %1117 = vmatpush2.msra.mxu0 0.0
      %1118 = vmatprep.subr.mxu0 0.0
      %1119 = vmatpush2.msra.mxu0 0.0
      %1120 = vmatprep.subr.mxu0 0.0
      %1121 = vmatpush2.msra.mxu0 0.0
      %1122 = vmatprep.subr.mxu0 0.0
      %1123 = vmatpush2.msra.mxu0 0.0
      %1124 = vmatprep.subr.mxu0 0.0
      %1125 = vmatpush2.msra.mxu0 0.0
      %1126 = vmatprep.subr.mxu0 0.0
      %1127 = vmatpush2.msra.mxu0 0.0
      %1128 = vmatprep.subr.mxu0 0.0
      %1129 = vmatpush2.msra.mxu0 0.0
      %1130 = vmatprep.subr.mxu0 0.0
      %1131 = vmatpush2.msra.mxu0 %v1069
      %1132 = vmatprep.subr.mxu0 0.0
      %1133 = vmatpush2.msra.mxu0 %v1068
      %1134 = vmatprep.mubr.f32.mxu0 %v979
      %1135 = vmatmul.mubr.f32.gmra.mxu0 %v957
      %v1136 = vpop.f32.mrf.mxu0
      %v1137 = vadd.f32 0.0, %v1136
      %v1138 = vpop.f32.mrf.mxu0
      %1139 = vdwg.mxu0
      %v1140 = vmax.f32 %v1048, %v1137
      %s1141 = scalar_lea.vmem %s3, 288
      %v1142 = vld [vmem:[%s1141] sm:$0xff]
      %v1143 = vld [vmem:[%s1141 + $0x8] sm:$0xff]
      %v1144 = vld [vmem:[%s1141 + $0x10] sm:$0xff]
      %v1145 = vld [vmem:[%s1141 + $0x18] sm:$0xff]
      %v1146 = vld [vmem:[%s1141 + $0x20] sm:$0xff]
      %v1147 = vld [vmem:[%s1141 + $0x28] sm:$0xff]
      %v1148 = vld [vmem:[%s1141 + $0x30] sm:$0xff]
      %v1149 = vld [vmem:[%s1141 + $0x38] sm:$0xff]
      %v1150 = vld [vmem:[%s1141 + $0x40] sm:$0xff]
      %v1151 = vld [vmem:[%s1141 + $0x48] sm:$0xff]
      %v1152 = vld [vmem:[%s1141 + $0x50] sm:$0xff]
      %v1153 = vld [vmem:[%s1141 + $0x58] sm:$0xff]
      %v1154 = vld [vmem:[%s1141 + $0x60] sm:$0xff]
      %v1155 = vld [vmem:[%s1141 + $0x68] sm:$0xff]
      %v1156 = vld [vmem:[%s1141 + $0x70] sm:$0xff]
      %v1157 = vld [vmem:[%s1141 + $0x78] sm:$0xff]
      %v1158 = vld [vmem:[%s1141 + $0x80] sm:$0xff]
      %v1159 = vld [vmem:[%s1141 + $0x88] sm:$0xff]
      %1160 = vmatprep.subr.mxu0 0.0
      %1161 = vmatpush1.msra.mxu0 %v1157
      %1162 = vmatprep.subr.mxu0 0.0
      %1163 = vmatpush1.msra.mxu0 %v1156
      %1164 = vmatprep.subr.mxu0 0.0
      %1165 = vmatpush1.msra.mxu0 %v1155
      %1166 = vmatprep.subr.mxu0 0.0
      %1167 = vmatpush1.msra.mxu0 %v1154
      %1168 = vmatprep.subr.mxu0 0.0
      %1169 = vmatpush1.msra.mxu0 %v1153
      %1170 = vmatprep.subr.mxu0 0.0
      %1171 = vmatpush1.msra.mxu0 %v1152
      %1172 = vmatprep.subr.mxu0 0.0
      %1173 = vmatpush1.msra.mxu0 %v1151
      %1174 = vmatprep.subr.mxu0 0.0
      %1175 = vmatpush1.msra.mxu0 %v1150
      %1176 = vmatprep.subr.mxu0 0.0
      %1177 = vmatpush1.msra.mxu0 %v1149
      %1178 = vmatprep.subr.mxu0 0.0
      %1179 = vmatpush1.msra.mxu0 %v1148
      %1180 = vmatprep.subr.mxu0 0.0
      %1181 = vmatpush1.msra.mxu0 %v1147
      %1182 = vmatprep.subr.mxu0 0.0
      %1183 = vmatpush1.msra.mxu0 %v1146
      %1184 = vmatprep.subr.mxu0 0.0
      %1185 = vmatpush1.msra.mxu0 %v1145
      %1186 = vmatprep.subr.mxu0 0.0
      %1187 = vmatpush1.msra.mxu0 %v1144
      %1188 = vmatprep.subr.mxu0 0.0
      %1189 = vmatpush1.msra.mxu0 %v1143
      %1190 = vmatprep.subr.mxu0 0.0
      %1191 = vmatpush1.msra.mxu0 %v1142
      %1192 = vmatprep.subr.mxu0 0.0
      %1193 = vmatpush2.msra.mxu0 0.0
      %1194 = vmatprep.subr.mxu0 0.0
      %1195 = vmatpush2.msra.mxu0 0.0
      %1196 = vmatprep.subr.mxu0 0.0
      %1197 = vmatpush2.msra.mxu0 0.0
      %1198 = vmatprep.subr.mxu0 0.0
      %1199 = vmatpush2.msra.mxu0 0.0
      %1200 = vmatprep.subr.mxu0 0.0
      %1201 = vmatpush2.msra.mxu0 0.0
      %1202 = vmatprep.subr.mxu0 0.0
      %1203 = vmatpush2.msra.mxu0 0.0
      %1204 = vmatprep.subr.mxu0 0.0
      %1205 = vmatpush2.msra.mxu0 0.0
      %1206 = vmatprep.subr.mxu0 0.0
      %1207 = vmatpush2.msra.mxu0 0.0
      %1208 = vmatprep.subr.mxu0 0.0
      %1209 = vmatpush2.msra.mxu0 0.0
      %1210 = vmatprep.subr.mxu0 0.0
      %1211 = vmatpush2.msra.mxu0 0.0
      %1212 = vmatprep.subr.mxu0 0.0
      %1213 = vmatpush2.msra.mxu0 0.0
      %1214 = vmatprep.subr.mxu0 0.0
      %1215 = vmatpush2.msra.mxu0 0.0
      %1216 = vmatprep.subr.mxu0 0.0
      %1217 = vmatpush2.msra.mxu0 0.0
      %1218 = vmatprep.subr.mxu0 0.0
      %1219 = vmatpush2.msra.mxu0 0.0
      %1220 = vmatprep.subr.mxu0 0.0
      %1221 = vmatpush2.msra.mxu0 %v1159
      %1222 = vmatprep.subr.mxu0 0.0
      %1223 = vmatpush2.msra.mxu0 %v1158
      %1224 = vmatprep.mubr.f32.mxu0 %v979
      %1225 = vmatmul.mubr.f32.gmra.mxu0 %v957
      %v1226 = vpop.f32.mrf.mxu0
      %v1227 = vadd.f32 0.0, %v1226
      %v1228 = vpop.f32.mrf.mxu0
      %1229 = vdwg.mxu0
      %v1230 = vmax.f32 %v1140, %v1227
      %s1231 = scalar_lea.vmem %s3, 432
      %v1232 = vld [vmem:[%s1231] sm:$0xff]
      %v1233 = vld [vmem:[%s1231 + $0x8] sm:$0xff]
      %v1234 = vld [vmem:[%s1231 + $0x10] sm:$0xff]
      %v1235 = vld [vmem:[%s1231 + $0x18] sm:$0xff]
      %v1236 = vld [vmem:[%s1231 + $0x20] sm:$0xff]
      %v1237 = vld [vmem:[%s1231 + $0x28] sm:$0xff]
      %v1238 = vld [vmem:[%s1231 + $0x30] sm:$0xff]
      %v1239 = vld [vmem:[%s1231 + $0x38] sm:$0xff]
      %v1240 = vld [vmem:[%s1231 + $0x40] sm:$0xff]
      %v1241 = vld [vmem:[%s1231 + $0x48] sm:$0xff]
      %v1242 = vld [vmem:[%s1231 + $0x50] sm:$0xff]
      %v1243 = vld [vmem:[%s1231 + $0x58] sm:$0xff]
      %v1244 = vld [vmem:[%s1231 + $0x60] sm:$0xff]
      %v1245 = vld [vmem:[%s1231 + $0x68] sm:$0xff]
      %v1246 = vld [vmem:[%s1231 + $0x70] sm:$0xff]
      %v1247 = vld [vmem:[%s1231 + $0x78] sm:$0xff]
      %v1248 = vld [vmem:[%s1231 + $0x80] sm:$0xff]
      %v1249 = vld [vmem:[%s1231 + $0x88] sm:$0xff]
      %1250 = vmatprep.subr.mxu0 0.0
      %1251 = vmatpush1.msra.mxu0 %v1247
      %1252 = vmatprep.subr.mxu0 0.0
      %1253 = vmatpush1.msra.mxu0 %v1246
      %1254 = vmatprep.subr.mxu0 0.0
      %1255 = vmatpush1.msra.mxu0 %v1245
      %1256 = vmatprep.subr.mxu0 0.0
      %1257 = vmatpush1.msra.mxu0 %v1244
      %1258 = vmatprep.subr.mxu0 0.0
      %1259 = vmatpush1.msra.mxu0 %v1243
      %1260 = vmatprep.subr.mxu0 0.0
      %1261 = vmatpush1.msra.mxu0 %v1242
      %1262 = vmatprep.subr.mxu0 0.0
      %1263 = vmatpush1.msra.mxu0 %v1241
      %1264 = vmatprep.subr.mxu0 0.0
      %1265 = vmatpush1.msra.mxu0 %v1240
      %1266 = vmatprep.subr.mxu0 0.0
      %1267 = vmatpush1.msra.mxu0 %v1239
      %1268 = vmatprep.subr.mxu0 0.0
      %1269 = vmatpush1.msra.mxu0 %v1238
      %1270 = vmatprep.subr.mxu0 0.0
      %1271 = vmatpush1.msra.mxu0 %v1237
      %1272 = vmatprep.subr.mxu0 0.0
      %1273 = vmatpush1.msra.mxu0 %v1236
      %1274 = vmatprep.subr.mxu0 0.0
      %1275 = vmatpush1.msra.mxu0 %v1235
      %1276 = vmatprep.subr.mxu0 0.0
      %1277 = vmatpush1.msra.mxu0 %v1234
      %1278 = vmatprep.subr.mxu0 0.0
      %1279 = vmatpush1.msra.mxu0 %v1233
      %1280 = vmatprep.subr.mxu0 0.0
      %1281 = vmatpush1.msra.mxu0 %v1232
      %1282 = vmatprep.subr.mxu0 0.0
      %1283 = vmatpush2.msra.mxu0 0.0
      %1284 = vmatprep.subr.mxu0 0.0
      %1285 = vmatpush2.msra.mxu0 0.0
      %1286 = vmatprep.subr.mxu0 0.0
      %1287 = vmatpush2.msra.mxu0 0.0
      %1288 = vmatprep.subr.mxu0 0.0
      %1289 = vmatpush2.msra.mxu0 0.0
      %1290 = vmatprep.subr.mxu0 0.0
      %1291 = vmatpush2.msra.mxu0 0.0
      %1292 = vmatprep.subr.mxu0 0.0
      %1293 = vmatpush2.msra.mxu0 0.0
      %1294 = vmatprep.subr.mxu0 0.0
      %1295 = vmatpush2.msra.mxu0 0.0
      %1296 = vmatprep.subr.mxu0 0.0
      %1297 = vmatpush2.msra.mxu0 0.0
      %1298 = vmatprep.subr.mxu0 0.0
      %1299 = vmatpush2.msra.mxu0 0.0
      %1300 = vmatprep.subr.mxu0 0.0
      %1301 = vmatpush2.msra.mxu0 0.0
      %1302 = vmatprep.subr.mxu0 0.0
      %1303 = vmatpush2.msra.mxu0 0.0
      %1304 = vmatprep.subr.mxu0 0.0
      %1305 = vmatpush2.msra.mxu0 0.0
      %1306 = vmatprep.subr.mxu0 0.0
      %1307 = vmatpush2.msra.mxu0 0.0
      %1308 = vmatprep.subr.mxu0 0.0
      %1309 = vmatpush2.msra.mxu0 0.0
      %1310 = vmatprep.subr.mxu0 0.0
      %1311 = vmatpush2.msra.mxu0 %v1249
      %1312 = vmatprep.subr.mxu0 0.0
      %1313 = vmatpush2.msra.mxu0 %v1248
      %1314 = vmatprep.mubr.f32.mxu0 %v979
      %1315 = vmatmul.mubr.f32.gmra.mxu0 %v957
      %v1316 = vpop.f32.mrf.mxu0
      %v1317 = vadd.f32 0.0, %v1316
      %v1318 = vpop.f32.mrf.mxu0
      %1319 = vdwg.mxu0
      %v1320 = vmax.f32 %v1230, %v1317
      %v1321 = vld [vmem:[%s4] sm:$0x1]
      %v1322 = vadd.f32 %v1320, %v1321
      %v1323 = vmax.f32 %v1322, 0.0
      %v1324 = vld [vmem:[%s5] sm:$0xff]
      %v1325 = vld [vmem:[%s5 + $0x8] sm:$0xff]
      %v1326 = vld [vmem:[%s6] sm:$0x3]
      %v1328 = vlaneseq
      %v1329 = vshrl.u32 %v1328, 7
      %v1330 = vsub.s32 0, %v1329
      %v1331 = vrot.slane %v1326, %v1330
      %v1332 = vlaneseq
      %v1333 = vshrl.u32 %v1332, 7
      %v1334 = vsub.s32 1, %v1333
      %v1335 = vrot.slane %v1326, %v1334
      %vm1338 = vcmask 64512
      %v1340 = vsel %vm1338, %v1323, 0
      %1342 = vmatprep.subr.mxu0 0.0
      %1343 = vmatpush1.msra.mxu0 0.0
      %1344 = vmatprep.subr.mxu0 0.0
      %1345 = vmatpush1.msra.mxu0 0.0
      %1346 = vmatprep.subr.mxu0 0.0
      %1347 = vmatpush1.msra.mxu0 0.0
      %1348 = vmatprep.subr.mxu0 0.0
      %1349 = vmatpush1.msra.mxu0 0.0
      %1350 = vmatprep.subr.mxu0 0.0
      %1351 = vmatpush1.msra.mxu0 0.0
      %1352 = vmatprep.subr.mxu0 0.0
      %1353 = vmatpush1.msra.mxu0 0.0
      %1354 = vmatprep.subr.mxu0 0.0
      %1355 = vmatpush1.msra.mxu0 0.0
      %1356 = vmatprep.subr.mxu0 0.0
      %1357 = vmatpush1.msra.mxu0 0.0
      %1358 = vmatprep.subr.mxu0 0.0
      %1359 = vmatpush1.msra.mxu0 0.0
      %1360 = vmatprep.subr.mxu0 0.0
      %1361 = vmatpush1.msra.mxu0 0.0
      %1362 = vmatprep.subr.mxu0 0.0
      %1363 = vmatpush1.msra.mxu0 0.0
      %1364 = vmatprep.subr.mxu0 0.0
      %1365 = vmatpush1.msra.mxu0 0.0
      %1366 = vmatprep.subr.mxu0 0.0
      %1367 = vmatpush1.msra.mxu0 0.0
      %1368 = vmatprep.subr.mxu0 0.0
      %1369 = vmatpush1.msra.mxu0 0.0
      %1370 = vmatprep.subr.mxu0 0.0
      %1371 = vmatpush1.msra.mxu0 0.0
      %1372 = vmatprep.subr.mxu0 %v1325
      %1373 = vmatpush1.msra.mxu0 %v1324
      %1374 = vmatprep.subr.mxu0 0.0
      %1375 = vmatpush2.msra.mxu0 0.0
      %1376 = vmatprep.subr.mxu0 0.0
      %1377 = vmatpush2.msra.mxu0 0.0
      %1378 = vmatprep.subr.mxu0 0.0
      %1379 = vmatpush2.msra.mxu0 0.0
      %1380 = vmatprep.subr.mxu0 0.0
      %1381 = vmatpush2.msra.mxu0 0.0
      %1382 = vmatprep.subr.mxu0 0.0
      %1383 = vmatpush2.msra.mxu0 0.0
      %1384 = vmatprep.subr.mxu0 0.0
      %1385 = vmatpush2.msra.mxu0 0.0
      %1386 = vmatprep.subr.mxu0 0.0
      %1387 = vmatpush2.msra.mxu0 0.0
      %1388 = vmatprep.subr.mxu0 0.0
      %1389 = vmatpush2.msra.mxu0 0.0
      %1390 = vmatprep.subr.mxu0 0.0
      %1391 = vmatpush2.msra.mxu0 0.0
      %1392 = vmatprep.subr.mxu0 0.0
      %1393 = vmatpush2.msra.mxu0 0.0
      %1394 = vmatprep.subr.mxu0 0.0
      %1395 = vmatpush2.msra.mxu0 0.0
      %1396 = vmatprep.subr.mxu0 0.0
      %1397 = vmatpush2.msra.mxu0 0.0
      %1398 = vmatprep.subr.mxu0 0.0
      %1399 = vmatpush2.msra.mxu0 0.0
      %1400 = vmatprep.subr.mxu0 0.0
      %1401 = vmatpush2.msra.mxu0 0.0
      %1402 = vmatprep.subr.mxu0 0.0
      %1403 = vmatpush2.msra.mxu0 0.0
      %1404 = vmatprep.subr.mxu0 0.0
      %1405 = vmatpush2.msra.mxu0 0.0
      %1406 = vmatprep.mubr.f32.mxu0 0.0
      %1407 = vmatmul.mubr.f32.gmra.mxu0 %v1340
      %v1408 = vpop.f32.mrf.mxu0
      %v1409 = vadd.f32 %v1331, %v1408
      %v1410 = vpop.f32.mrf.mxu0
      %v1411 = vadd.f32 %v1335, %v1410
      %1412 = vdwg.mxu0
      %v1413 = vmax.f32 %v1409, 0.0
      %v1414 = vmax.f32 %v1411, 0.0
      %v1415 = vld [vmem:[%s7] sm:$0xff]
      %v1416 = vld [vmem:[%s7 + $0x8] sm:$0xff]
      %v1417 = vld [vmem:[%s7 + $0x10] sm:$0xff]
      %v1418 = vld [vmem:[%s7 + $0x18] sm:$0xff]
      %v1419 = vld [vmem:[%s7 + $0x20] sm:$0xff]
      %v1420 = vld [vmem:[%s7 + $0x28] sm:$0xff]
      %v1421 = vld [vmem:[%s7 + $0x30] sm:$0xff]
      %v1422 = vld [vmem:[%s7 + $0x38] sm:$0xff]
      %v1423 = vld [vmem:[%s7 + $0x40] sm:$0xff]
      %v1424 = vld [vmem:[%s7 + $0x48] sm:$0xff]
      %v1425 = vld [vmem:[%s7 + $0x50] sm:$0xff]
      %v1426 = vld [vmem:[%s7 + $0x58] sm:$0xff]
      %v1427 = vld [vmem:[%s7 + $0x60] sm:$0xff]
      %v1428 = vld [vmem:[%s7 + $0x68] sm:$0xff]
      %v1429 = vld [vmem:[%s7 + $0x70] sm:$0xff]
      %v1430 = vld [vmem:[%s7 + $0x78] sm:$0xff]
      %v1431 = vld [vmem:[%s7 + $0x80] sm:$0xff]
      %v1432 = vld [vmem:[%s7 + $0x88] sm:$0xff]
      %v1433 = vld [vmem:[%s7 + $0x90] sm:$0xff]
      %v1434 = vld [vmem:[%s7 + $0x98] sm:$0xff]
      %v1435 = vld [vmem:[%s7 + $0xa0] sm:$0xff]
      %v1436 = vld [vmem:[%s7 + $0xa8] sm:$0xff]
      %v1437 = vld [vmem:[%s7 + $0xb0] sm:$0xff]
      %v1438 = vld [vmem:[%s7 + $0xb8] sm:$0xff]
      %v1439 = vld [vmem:[%s7 + $0xc0] sm:$0xff]
      %v1440 = vld [vmem:[%s7 + $0xc8] sm:$0xff]
      %v1441 = vld [vmem:[%s7 + $0xd0] sm:$0xff]
      %v1442 = vld [vmem:[%s7 + $0xd8] sm:$0xff]
      %v1443 = vld [vmem:[%s7 + $0xe0] sm:$0xff]
      %v1444 = vld [vmem:[%s7 + $0xe8] sm:$0xff]
      %v1445 = vld [vmem:[%s7 + $0xf0] sm:$0xff]
      %v1446 = vld [vmem:[%s7 + $0xf8] sm:$0xff]
      %v1447 = vld [vmem:[%s7 + $0x100] sm:$0xff]
      %v1448 = vld [vmem:[%s7 + $0x108] sm:$0xff]
      %v1449 = vld [vmem:[%s7 + $0x110] sm:$0xff]
      %v1450 = vld [vmem:[%s7 + $0x118] sm:$0xff]
      %v1451 = vld [vmem:[%s7 + $0x120] sm:$0xff]
      %v1452 = vld [vmem:[%s7 + $0x128] sm:$0xff]
      %v1453 = vld [vmem:[%s7 + $0x130] sm:$0xff]
      %v1454 = vld [vmem:[%s7 + $0x138] sm:$0xff]
      %v1455 = vld [vmem:[%s7 + $0x140] sm:$0xff]
      %v1456 = vld [vmem:[%s7 + $0x148] sm:$0xff]
      %v1457 = vld [vmem:[%s7 + $0x150] sm:$0xff]
      %v1458 = vld [vmem:[%s7 + $0x158] sm:$0xff]
      %v1459 = vld [vmem:[%s7 + $0x160] sm:$0xff]
      %v1460 = vld [vmem:[%s7 + $0x168] sm:$0xff]
      %v1461 = vld [vmem:[%s7 + $0x170] sm:$0xff]
      %v1462 = vld [vmem:[%s7 + $0x178] sm:$0xff]
      %v1463 = vld [vmem:[%s7 + $0x180] sm:$0xff]
      %v1464 = vld [vmem:[%s7 + $0x188] sm:$0xff]
      %v1465 = vld [vmem:[%s7 + $0x190] sm:$0xff]
      %v1466 = vld [vmem:[%s7 + $0x198] sm:$0xff]
      %v1467 = vld [vmem:[%s7 + $0x1a0] sm:$0xff]
      %v1468 = vld [vmem:[%s7 + $0x1a8] sm:$0xff]
      %v1469 = vld [vmem:[%s7 + $0x1b0] sm:$0xff]
      %v1470 = vld [vmem:[%s7 + $0x1b8] sm:$0xff]
      %v1471 = vld [vmem:[%s7 + $0x1c0] sm:$0xff]
      %v1472 = vld [vmem:[%s7 + $0x1c8] sm:$0xff]
      %v1473 = vld [vmem:[%s7 + $0x1d0] sm:$0xff]
      %v1474 = vld [vmem:[%s7 + $0x1d8] sm:$0xff]
      %v1475 = vld [vmem:[%s7 + $0x1e0] sm:$0xff]
      %v1476 = vld [vmem:[%s7 + $0x1e8] sm:$0xff]
      %v1477 = vld [vmem:[%s7 + $0x1f0] sm:$0xff]
      %v1478 = vld [vmem:[%s7 + $0x1f8] sm:$0xff]
      %v1479 = vld [vmem:[%s7 + $0x200] sm:$0xff]
      %v1480 = vld [vmem:[%s7 + $0x208] sm:$0xff]
      %v1481 = vld [vmem:[%s7 + $0x210] sm:$0xff]
      %v1482 = vld [vmem:[%s7 + $0x218] sm:$0xff]
      %v1483 = vld [vmem:[%s7 + $0x220] sm:$0xff]
      %v1484 = vld [vmem:[%s7 + $0x228] sm:$0xff]
      %v1485 = vld [vmem:[%s7 + $0x230] sm:$0xff]
      %v1486 = vld [vmem:[%s7 + $0x238] sm:$0xff]
      %v1487 = vld [vmem:[%s7 + $0x240] sm:$0xff]
      %v1488 = vld [vmem:[%s7 + $0x248] sm:$0xff]
      %v1489 = vld [vmem:[%s7 + $0x250] sm:$0xff]
      %v1490 = vld [vmem:[%s7 + $0x258] sm:$0xff]
      %v1491 = vld [vmem:[%s7 + $0x260] sm:$0xff]
      %v1492 = vld [vmem:[%s7 + $0x268] sm:$0xff]
      %v1493 = vld [vmem:[%s7 + $0x270] sm:$0xff]
      %v1494 = vld [vmem:[%s7 + $0x278] sm:$0xff]
      %v1495 = vld [vmem:[%s7 + $0x280] sm:$0xff]
      %v1496 = vld [vmem:[%s7 + $0x288] sm:$0xff]
      %v1497 = vld [vmem:[%s7 + $0x290] sm:$0xff]
      %v1498 = vld [vmem:[%s7 + $0x298] sm:$0xff]
      %v1499 = vld [vmem:[%s7 + $0x2a0] sm:$0xff]
      %v1500 = vld [vmem:[%s7 + $0x2a8] sm:$0xff]
      %v1501 = vld [vmem:[%s7 + $0x2b0] sm:$0xff]
      %v1502 = vld [vmem:[%s7 + $0x2b8] sm:$0xff]
      %v1503 = vld [vmem:[%s7 + $0x2c0] sm:$0xff]
      %v1504 = vld [vmem:[%s7 + $0x2c8] sm:$0xff]
      %v1505 = vld [vmem:[%s7 + $0x2d0] sm:$0xff]
      %v1506 = vld [vmem:[%s7 + $0x2d8] sm:$0xff]
      %v1507 = vld [vmem:[%s7 + $0x2e0] sm:$0xff]
      %v1508 = vld [vmem:[%s7 + $0x2e8] sm:$0xff]
      %v1509 = vld [vmem:[%s7 + $0x2f0] sm:$0xff]
      %v1510 = vld [vmem:[%s7 + $0x2f8] sm:$0xff]
      %v1511 = vld [vmem:[%s7 + $0x300] sm:$0xff]
      %v1512 = vld [vmem:[%s7 + $0x308] sm:$0xff]
      %v1513 = vld [vmem:[%s7 + $0x310] sm:$0xff]
      %v1514 = vld [vmem:[%s7 + $0x318] sm:$0xff]
      %v1515 = vld [vmem:[%s7 + $0x320] sm:$0xff]
      %v1516 = vld [vmem:[%s7 + $0x328] sm:$0xff]
      %v1517 = vld [vmem:[%s7 + $0x330] sm:$0xff]
      %v1518 = vld [vmem:[%s7 + $0x338] sm:$0xff]
      %v1519 = vld [vmem:[%s7 + $0x340] sm:$0xff]
      %v1520 = vld [vmem:[%s7 + $0x348] sm:$0xff]
      %v1521 = vld [vmem:[%s7 + $0x350] sm:$0xff]
      %v1522 = vld [vmem:[%s7 + $0x358] sm:$0xff]
      %v1523 = vld [vmem:[%s8] sm:$0x3f]
      %v1525 = vlaneseq
      %v1526 = vshrl.u32 %v1525, 7
      %v1527 = vsub.s32 0, %v1526
      %v1528 = vrot.slane %v1523, %v1527
      %v1529 = vlaneseq
      %v1530 = vshrl.u32 %v1529, 7
      %v1531 = vsub.s32 1, %v1530
      %v1532 = vrot.slane %v1523, %v1531
      %v1533 = vlaneseq
      %v1534 = vshrl.u32 %v1533, 7
      %v1535 = vsub.s32 2, %v1534
      %v1536 = vrot.slane %v1523, %v1535
      %v1537 = vlaneseq
      %v1538 = vshrl.u32 %v1537, 7
      %v1539 = vsub.s32 3, %v1538
      %v1540 = vrot.slane %v1523, %v1539
      %v1541 = vlaneseq
      %v1542 = vshrl.u32 %v1541, 7
      %v1543 = vsub.s32 4, %v1542
      %v1544 = vrot.slane %v1523, %v1543
      %v1545 = vlaneseq
      %v1546 = vshrl.u32 %v1545, 7
      %v1547 = vsub.s32 5, %v1546
      %v1548 = vrot.slane %v1523, %v1547
      %v1556 = vsel %vm977, %v1414, 0
      %1558 = vmatprep.subr.mxu0 %v1506
      %1559 = vmatpush1.msra.mxu0 %v1505
      %1560 = vmatprep.subr.mxu0 %v1500
      %1561 = vmatpush1.msra.mxu0 %v1499
      %1562 = vmatprep.subr.mxu0 %v1494
      %1563 = vmatpush1.msra.mxu0 %v1493
      %1564 = vmatprep.subr.mxu0 %v1488
      %1565 = vmatpush1.msra.mxu0 %v1487
      %1566 = vmatprep.subr.mxu0 %v1482
      %1567 = vmatpush1.msra.mxu0 %v1481
      %1568 = vmatprep.subr.mxu0 %v1476
      %1569 = vmatpush1.msra.mxu0 %v1475
      %1570 = vmatprep.subr.mxu0 %v1470
      %1571 = vmatpush1.msra.mxu0 %v1469
      %1572 = vmatprep.subr.mxu0 %v1464
      %1573 = vmatpush1.msra.mxu0 %v1463
      %1574 = vmatprep.subr.mxu0 %v1458
      %1575 = vmatpush1.msra.mxu0 %v1457
      %1576 = vmatprep.subr.mxu0 %v1452
      %1577 = vmatpush1.msra.mxu0 %v1451
      %1578 = vmatprep.subr.mxu0 %v1446
      %1579 = vmatpush1.msra.mxu0 %v1445
      %1580 = vmatprep.subr.mxu0 %v1440
      %1581 = vmatpush1.msra.mxu0 %v1439
      %1582 = vmatprep.subr.mxu0 %v1434
      %1583 = vmatpush1.msra.mxu0 %v1433
      %1584 = vmatprep.subr.mxu0 %v1428
      %1585 = vmatpush1.msra.mxu0 %v1427
      %1586 = vmatprep.subr.mxu0 %v1422
      %1587 = vmatpush1.msra.mxu0 %v1421
      %1588 = vmatprep.subr.mxu0 %v1416
      %1589 = vmatpush1.msra.mxu0 %v1415
      %1590 = vmatprep.subr.mxu0 0.0
      %1591 = vmatpush2.msra.mxu0 0.0
      %1592 = vmatprep.subr.mxu0 0.0
      %1593 = vmatpush2.msra.mxu0 0.0
      %1594 = vmatprep.subr.mxu0 0.0
      %1595 = vmatpush2.msra.mxu0 0.0
      %1596 = vmatprep.subr.mxu0 0.0
      %1597 = vmatpush2.msra.mxu0 0.0
      %1598 = vmatprep.subr.mxu0 0.0
      %1599 = vmatpush2.msra.mxu0 0.0
      %1600 = vmatprep.subr.mxu0 0.0
      %1601 = vmatpush2.msra.mxu0 0.0
      %1602 = vmatprep.subr.mxu0 0.0
      %1603 = vmatpush2.msra.mxu0 0.0
      %1604 = vmatprep.subr.mxu0 0.0
      %1605 = vmatpush2.msra.mxu0 0.0
      %1606 = vmatprep.subr.mxu0 0.0
      %1607 = vmatpush2.msra.mxu0 0.0
      %1608 = vmatprep.subr.mxu0 0.0
      %1609 = vmatpush2.msra.mxu0 0.0
      %1610 = vmatprep.subr.mxu0 0.0
      %1611 = vmatpush2.msra.mxu0 0.0
      %1612 = vmatprep.subr.mxu0 0.0
      %1613 = vmatpush2.msra.mxu0 0.0
      %1614 = vmatprep.subr.mxu0 0.0
      %1615 = vmatpush2.msra.mxu0 0.0
      %1616 = vmatprep.subr.mxu0 0.0
      %1617 = vmatpush2.msra.mxu0 0.0
      %1618 = vmatprep.subr.mxu0 %v1518
      %1619 = vmatpush2.msra.mxu0 %v1517
      %1620 = vmatprep.subr.mxu0 %v1512
      %1621 = vmatpush2.msra.mxu0 %v1511
      %1622 = vmatprep.mubr.f32.mxu0 %v1556
      %1623 = vmatmul.mubr.f32.gmra.mxu0 %v1413
      %v1624 = vpop.f32.mrf.mxu0
      %v1625 = vadd.f32 %v1528, %v1624
      %v1626 = vpop.f32.mrf.mxu0
      %v1627 = vadd.f32 %v1532, %v1626
      %1628 = vdwg.mxu0
      %1629 = vmatprep.subr.mxu0 %v1508
      %1630 = vmatpush1.msra.mxu0 %v1507
      %1631 = vmatprep.subr.mxu0 %v1502
      %1632 = vmatpush1.msra.mxu0 %v1501
      %1633 = vmatprep.subr.mxu0 %v1496
      %1634 = vmatpush1.msra.mxu0 %v1495
      %1635 = vmatprep.subr.mxu0 %v1490
      %1636 = vmatpush1.msra.mxu0 %v1489
      %1637 = vmatprep.subr.mxu0 %v1484
      %1638 = vmatpush1.msra.mxu0 %v1483
      %1639 = vmatprep.subr.mxu0 %v1478
      %1640 = vmatpush1.msra.mxu0 %v1477
      %1641 = vmatprep.subr.mxu0 %v1472
      %1642 = vmatpush1.msra.mxu0 %v1471
      %1643 = vmatprep.subr.mxu0 %v1466
      %1644 = vmatpush1.msra.mxu0 %v1465
      %1645 = vmatprep.subr.mxu0 %v1460
      %1646 = vmatpush1.msra.mxu0 %v1459
      %1647 = vmatprep.subr.mxu0 %v1454
      %1648 = vmatpush1.msra.mxu0 %v1453
      %1649 = vmatprep.subr.mxu0 %v1448
      %1650 = vmatpush1.msra.mxu0 %v1447
      %1651 = vmatprep.subr.mxu0 %v1442
      %1652 = vmatpush1.msra.mxu0 %v1441
      %1653 = vmatprep.subr.mxu0 %v1436
      %1654 = vmatpush1.msra.mxu0 %v1435
      %1655 = vmatprep.subr.mxu0 %v1430
      %1656 = vmatpush1.msra.mxu0 %v1429
      %1657 = vmatprep.subr.mxu0 %v1424
      %1658 = vmatpush1.msra.mxu0 %v1423
      %1659 = vmatprep.subr.mxu0 %v1418
      %1660 = vmatpush1.msra.mxu0 %v1417
      %1661 = vmatprep.subr.mxu0 0.0
      %1662 = vmatpush2.msra.mxu0 0.0
      %1663 = vmatprep.subr.mxu0 0.0
      %1664 = vmatpush2.msra.mxu0 0.0
      %1665 = vmatprep.subr.mxu0 0.0
      %1666 = vmatpush2.msra.mxu0 0.0
      %1667 = vmatprep.subr.mxu0 0.0
      %1668 = vmatpush2.msra.mxu0 0.0
      %1669 = vmatprep.subr.mxu0 0.0
      %1670 = vmatpush2.msra.mxu0 0.0
      %1671 = vmatprep.subr.mxu0 0.0
      %1672 = vmatpush2.msra.mxu0 0.0
      %1673 = vmatprep.subr.mxu0 0.0
      %1674 = vmatpush2.msra.mxu0 0.0
      %1675 = vmatprep.subr.mxu0 0.0
      %1676 = vmatpush2.msra.mxu0 0.0
      %1677 = vmatprep.subr.mxu0 0.0
      %1678 = vmatpush2.msra.mxu0 0.0
      %1679 = vmatprep.subr.mxu0 0.0
      %1680 = vmatpush2.msra.mxu0 0.0
      %1681 = vmatprep.subr.mxu0 0.0
      %1682 = vmatpush2.msra.mxu0 0.0
      %1683 = vmatprep.subr.mxu0 0.0
      %1684 = vmatpush2.msra.mxu0 0.0
      %1685 = vmatprep.subr.mxu0 0.0
      %1686 = vmatpush2.msra.mxu0 0.0
      %1687 = vmatprep.subr.mxu0 0.0
      %1688 = vmatpush2.msra.mxu0 0.0
      %1689 = vmatprep.subr.mxu0 %v1520
      %1690 = vmatpush2.msra.mxu0 %v1519
      %1691 = vmatprep.subr.mxu0 %v1514
      %1692 = vmatpush2.msra.mxu0 %v1513
      %1693 = vmatprep.mubr.f32.mxu0 %v1556
      %1694 = vmatmul.mubr.f32.gmra.mxu0 %v1413
      %v1695 = vpop.f32.mrf.mxu0
      %v1696 = vadd.f32 %v1536, %v1695
      %v1697 = vpop.f32.mrf.mxu0
      %v1698 = vadd.f32 %v1540, %v1697
      %1699 = vdwg.mxu0
      %1700 = vmatprep.subr.mxu0 %v1510
      %1701 = vmatpush1.msra.mxu0 %v1509
      %1702 = vmatprep.subr.mxu0 %v1504
      %1703 = vmatpush1.msra.mxu0 %v1503
      %1704 = vmatprep.subr.mxu0 %v1498
      %1705 = vmatpush1.msra.mxu0 %v1497
      %1706 = vmatprep.subr.mxu0 %v1492
      %1707 = vmatpush1.msra.mxu0 %v1491
      %1708 = vmatprep.subr.mxu0 %v1486
      %1709 = vmatpush1.msra.mxu0 %v1485
      %1710 = vmatprep.subr.mxu0 %v1480
      %1711 = vmatpush1.msra.mxu0 %v1479
      %1712 = vmatprep.subr.mxu0 %v1474
      %1713 = vmatpush1.msra.mxu0 %v1473
      %1714 = vmatprep.subr.mxu0 %v1468
      %1715 = vmatpush1.msra.mxu0 %v1467
      %1716 = vmatprep.subr.mxu0 %v1462
      %1717 = vmatpush1.msra.mxu0 %v1461
      %1718 = vmatprep.subr.mxu0 %v1456
      %1719 = vmatpush1.msra.mxu0 %v1455
      %1720 = vmatprep.subr.mxu0 %v1450
      %1721 = vmatpush1.msra.mxu0 %v1449
      %1722 = vmatprep.subr.mxu0 %v1444
      %1723 = vmatpush1.msra.mxu0 %v1443
      %1724 = vmatprep.subr.mxu0 %v1438
      %1725 = vmatpush1.msra.mxu0 %v1437
      %1726 = vmatprep.subr.mxu0 %v1432
      %1727 = vmatpush1.msra.mxu0 %v1431
      %1728 = vmatprep.subr.mxu0 %v1426
      %1729 = vmatpush1.msra.mxu0 %v1425
      %1730 = vmatprep.subr.mxu0 %v1420
      %1731 = vmatpush1.msra.mxu0 %v1419
      %1732 = vmatprep.subr.mxu0 0.0
      %1733 = vmatpush2.msra.mxu0 0.0
      %1734 = vmatprep.subr.mxu0 0.0
      %1735 = vmatpush2.msra.mxu0 0.0
      %1736 = vmatprep.subr.mxu0 0.0
      %1737 = vmatpush2.msra.mxu0 0.0
      %1738 = vmatprep.subr.mxu0 0.0
      %1739 = vmatpush2.msra.mxu0 0.0
      %1740 = vmatprep.subr.mxu0 0.0
      %1741 = vmatpush2.msra.mxu0 0.0
      %1742 = vmatprep.subr.mxu0 0.0
      %1743 = vmatpush2.msra.mxu0 0.0
      %1744 = vmatprep.subr.mxu0 0.0
      %1745 = vmatpush2.msra.mxu0 0.0
      %1746 = vmatprep.subr.mxu0 0.0
      %1747 = vmatpush2.msra.mxu0 0.0
      %1748 = vmatprep.subr.mxu0 0.0
      %1749 = vmatpush2.msra.mxu0 0.0
      %1750 = vmatprep.subr.mxu0 0.0
      %1751 = vmatpush2.msra.mxu0 0.0
      %1752 = vmatprep.subr.mxu0 0.0
      %1753 = vmatpush2.msra.mxu0 0.0
      %1754 = vmatprep.subr.mxu0 0.0
      %1755 = vmatpush2.msra.mxu0 0.0
      %1756 = vmatprep.subr.mxu0 0.0
      %1757 = vmatpush2.msra.mxu0 0.0
      %1758 = vmatprep.subr.mxu0 0.0
      %1759 = vmatpush2.msra.mxu0 0.0
      %1760 = vmatprep.subr.mxu0 %v1522
      %1761 = vmatpush2.msra.mxu0 %v1521
      %1762 = vmatprep.subr.mxu0 %v1516
      %1763 = vmatpush2.msra.mxu0 %v1515
      %1764 = vmatprep.mubr.f32.mxu0 %v1556
      %1765 = vmatmul.mubr.f32.gmra.mxu0 %v1413
      %v1766 = vpop.f32.mrf.mxu0
      %v1767 = vadd.f32 %v1544, %v1766
      %v1768 = vpop.f32.mrf.mxu0
      %v1769 = vadd.f32 %v1548, %v1768
      %1770 = vdwg.mxu0
      %v1771 = vmax.f32 %v1625, 0.0
      %v1772 = vmax.f32 %v1627, 0.0
      %v1773 = vmax.f32 %v1696, 0.0
      %v1774 = vmax.f32 %v1698, 0.0
      %v1775 = vmax.f32 %v1767, 0.0
      %v1776 = vmax.f32 %v1769, 0.0
      %v1777 = vld [vmem:[%s9] sm:$0xff]
      %v1778 = vld [vmem:[%s9 + $0x8] sm:$0xff]
      %v1779 = vld [vmem:[%s9 + $0x10] sm:$0xff]
      %v1780 = vld [vmem:[%s9 + $0x18] sm:$0xff]
      %v1781 = vld [vmem:[%s9 + $0x20] sm:$0xff]
      %v1782 = vld [vmem:[%s9 + $0x28] sm:$0xff]
      %v1783 = vld [vmem:[%s9 + $0x30] sm:$0xff]
      %v1784 = vld [vmem:[%s9 + $0x38] sm:$0xff]
      %v1785 = vld [vmem:[%s9 + $0x40] sm:$0xff]
      %v1786 = vld [vmem:[%s9 + $0x48] sm:$0xff]
      %v1787 = vld [vmem:[%s9 + $0x50] sm:$0xff]
      %v1788 = vld [vmem:[%s9 + $0x58] sm:$0xff]
      %v1789 = vld [vmem:[%s9 + $0x60] sm:$0xff]
      %v1790 = vld [vmem:[%s9 + $0x68] sm:$0xff]
      %v1791 = vld [vmem:[%s9 + $0x70] sm:$0xff]
      %v1792 = vld [vmem:[%s9 + $0x78] sm:$0xff]
      %v1793 = vld [vmem:[%s9 + $0x80] sm:$0xff]
      %v1794 = vld [vmem:[%s9 + $0x88] sm:$0xff]
      %v1795 = vld [vmem:[%s9 + $0x90] sm:$0xff]
      %v1796 = vld [vmem:[%s9 + $0x98] sm:$0xff]
      %v1797 = vld [vmem:[%s9 + $0xa0] sm:$0xff]
      %v1798 = vld [vmem:[%s9 + $0xa8] sm:$0xff]
      %v1799 = vld [vmem:[%s9 + $0xb0] sm:$0xff]
      %v1800 = vld [vmem:[%s9 + $0xb8] sm:$0xff]
      %v1801 = vld [vmem:[%s9 + $0xc0] sm:$0xff]
      %v1802 = vld [vmem:[%s9 + $0xc8] sm:$0xff]
      %v1803 = vld [vmem:[%s9 + $0xd0] sm:$0xff]
      %v1804 = vld [vmem:[%s9 + $0xd8] sm:$0xff]
      %v1805 = vld [vmem:[%s9 + $0xe0] sm:$0xff]
      %v1806 = vld [vmem:[%s9 + $0xe8] sm:$0xff]
      %v1807 = vld [vmem:[%s9 + $0xf0] sm:$0xff]
      %v1808 = vld [vmem:[%s9 + $0xf8] sm:$0xff]
      %v1809 = vld [vmem:[%s9 + $0x100] sm:$0xff]
      %v1810 = vld [vmem:[%s9 + $0x108] sm:$0xff]
      %v1811 = vld [vmem:[%s9 + $0x110] sm:$0xff]
      %v1812 = vld [vmem:[%s9 + $0x118] sm:$0xff]
      %v1813 = vld [vmem:[%s9 + $0x120] sm:$0xff]
      %v1814 = vld [vmem:[%s9 + $0x128] sm:$0xff]
      %v1815 = vld [vmem:[%s9 + $0x130] sm:$0xff]
      %v1816 = vld [vmem:[%s9 + $0x138] sm:$0xff]
      %v1817 = vld [vmem:[%s9 + $0x140] sm:$0xff]
      %v1818 = vld [vmem:[%s9 + $0x148] sm:$0xff]
      %v1819 = vld [vmem:[%s9 + $0x150] sm:$0xff]
      %v1820 = vld [vmem:[%s9 + $0x158] sm:$0xff]
      %v1821 = vld [vmem:[%s9 + $0x160] sm:$0xff]
      %v1822 = vld [vmem:[%s9 + $0x168] sm:$0xff]
      %v1823 = vld [vmem:[%s9 + $0x170] sm:$0xff]
      %v1824 = vld [vmem:[%s9 + $0x178] sm:$0xff]
      %v1825 = vld [vmem:[%s9 + $0x180] sm:$0xff]
      %v1826 = vld [vmem:[%s9 + $0x188] sm:$0xff]
      %v1827 = vld [vmem:[%s9 + $0x190] sm:$0xff]
      %v1828 = vld [vmem:[%s9 + $0x198] sm:$0xff]
      %v1829 = vld [vmem:[%s9 + $0x1a0] sm:$0xff]
      %v1830 = vld [vmem:[%s9 + $0x1a8] sm:$0xff]
      %v1831 = vld [vmem:[%s9 + $0x1b0] sm:$0xff]
      %v1832 = vld [vmem:[%s9 + $0x1b8] sm:$0xff]
      %v1833 = vld [vmem:[%s9 + $0x1c0] sm:$0xff]
      %v1834 = vld [vmem:[%s9 + $0x1c8] sm:$0xff]
      %v1835 = vld [vmem:[%s9 + $0x1d0] sm:$0xff]
      %v1836 = vld [vmem:[%s9 + $0x1d8] sm:$0xff]
      %v1837 = vld [vmem:[%s9 + $0x1e0] sm:$0xff]
      %v1838 = vld [vmem:[%s9 + $0x1e8] sm:$0xff]
      %v1839 = vld [vmem:[%s9 + $0x1f0] sm:$0xff]
      %v1840 = vld [vmem:[%s9 + $0x1f8] sm:$0xff]
      %v1841 = vld [vmem:[%s9 + $0x200] sm:$0xff]
      %v1842 = vld [vmem:[%s9 + $0x208] sm:$0xff]
      %v1843 = vld [vmem:[%s9 + $0x210] sm:$0xff]
      %v1844 = vld [vmem:[%s9 + $0x218] sm:$0xff]
      %v1845 = vld [vmem:[%s9 + $0x220] sm:$0xff]
      %v1846 = vld [vmem:[%s9 + $0x228] sm:$0xff]
      %v1847 = vld [vmem:[%s9 + $0x230] sm:$0xff]
      %v1848 = vld [vmem:[%s9 + $0x238] sm:$0xff]
      %v1849 = vld [vmem:[%s9 + $0x240] sm:$0xff]
      %v1850 = vld [vmem:[%s9 + $0x248] sm:$0xff]
      %v1851 = vld [vmem:[%s9 + $0x250] sm:$0xff]
      %v1852 = vld [vmem:[%s9 + $0x258] sm:$0xff]
      %v1853 = vld [vmem:[%s9 + $0x260] sm:$0xff]
      %v1854 = vld [vmem:[%s9 + $0x268] sm:$0xff]
      %v1855 = vld [vmem:[%s9 + $0x270] sm:$0xff]
      %v1856 = vld [vmem:[%s9 + $0x278] sm:$0xff]
      %v1857 = vld [vmem:[%s9 + $0x280] sm:$0xff]
      %v1858 = vld [vmem:[%s9 + $0x288] sm:$0xff]
      %v1859 = vld [vmem:[%s9 + $0x290] sm:$0xff]
      %v1860 = vld [vmem:[%s9 + $0x298] sm:$0xff]
      %v1861 = vld [vmem:[%s9 + $0x2a0] sm:$0xff]
      %v1862 = vld [vmem:[%s9 + $0x2a8] sm:$0xff]
      %v1863 = vld [vmem:[%s9 + $0x2b0] sm:$0xff]
      %v1864 = vld [vmem:[%s9 + $0x2b8] sm:$0xff]
      %v1865 = vld [vmem:[%s9 + $0x2c0] sm:$0xff]
      %v1866 = vld [vmem:[%s9 + $0x2c8] sm:$0xff]
      %v1867 = vld [vmem:[%s9 + $0x2d0] sm:$0xff]
      %v1868 = vld [vmem:[%s9 + $0x2d8] sm:$0xff]
      %v1869 = vld [vmem:[%s9 + $0x2e0] sm:$0xff]
      %v1870 = vld [vmem:[%s9 + $0x2e8] sm:$0xff]
      %v1871 = vld [vmem:[%s9 + $0x2f0] sm:$0xff]
      %v1872 = vld [vmem:[%s9 + $0x2f8] sm:$0xff]
      %v1873 = vld [vmem:[%s9 + $0x300] sm:$0xff]
      %v1874 = vld [vmem:[%s9 + $0x308] sm:$0xff]
      %v1875 = vld [vmem:[%s9 + $0x310] sm:$0xff]
      %v1876 = vld [vmem:[%s9 + $0x318] sm:$0xff]
      %v1877 = vld [vmem:[%s9 + $0x320] sm:$0xff]
      %v1878 = vld [vmem:[%s9 + $0x328] sm:$0xff]
      %v1879 = vld [vmem:[%s9 + $0x330] sm:$0xff]
      %v1880 = vld [vmem:[%s9 + $0x338] sm:$0xff]
      %v1881 = vld [vmem:[%s9 + $0x340] sm:$0xff]
      %v1882 = vld [vmem:[%s9 + $0x348] sm:$0xff]
      %v1883 = vld [vmem:[%s9 + $0x350] sm:$0xff]
      %v1884 = vld [vmem:[%s9 + $0x358] sm:$0xff]
      %v1885 = vld [vmem:[%s9 + $0x360] sm:$0xff]
      %v1886 = vld [vmem:[%s9 + $0x368] sm:$0xff]
      %v1887 = vld [vmem:[%s9 + $0x370] sm:$0xff]
      %v1888 = vld [vmem:[%s9 + $0x378] sm:$0xff]
      %v1889 = vld [vmem:[%s9 + $0x380] sm:$0xff]
      %v1890 = vld [vmem:[%s9 + $0x388] sm:$0xff]
      %v1891 = vld [vmem:[%s9 + $0x390] sm:$0xff]
      %v1892 = vld [vmem:[%s9 + $0x398] sm:$0xff]
      %v1893 = vld [vmem:[%s9 + $0x3a0] sm:$0xff]
      %v1894 = vld [vmem:[%s9 + $0x3a8] sm:$0xff]
      %v1895 = vld [vmem:[%s9 + $0x3b0] sm:$0xff]
      %v1896 = vld [vmem:[%s9 + $0x3b8] sm:$0xff]
      %v1897 = vld [vmem:[%s9 + $0x3c0] sm:$0xff]
      %v1898 = vld [vmem:[%s9 + $0x3c8] sm:$0xff]
      %v1899 = vld [vmem:[%s9 + $0x3d0] sm:$0xff]
      %v1900 = vld [vmem:[%s9 + $0x3d8] sm:$0xff]
      %v1901 = vld [vmem:[%s9 + $0x3e0] sm:$0xff]
      %v1902 = vld [vmem:[%s9 + $0x3e8] sm:$0xff]
      %v1903 = vld [vmem:[%s9 + $0x3f0] sm:$0xff]
      %v1904 = vld [vmem:[%s9 + $0x3f8] sm:$0xff]
      %v1905 = vld [vmem:[%s9 + $0x400] sm:$0xff]
      %v1906 = vld [vmem:[%s9 + $0x408] sm:$0xff]
      %v1907 = vld [vmem:[%s9 + $0x410] sm:$0xff]
      %v1908 = vld [vmem:[%s9 + $0x418] sm:$0xff]
      %v1909 = vld [vmem:[%s9 + $0x420] sm:$0xff]
      %v1910 = vld [vmem:[%s9 + $0x428] sm:$0xff]
      %v1911 = vld [vmem:[%s9 + $0x430] sm:$0xff]
      %v1912 = vld [vmem:[%s9 + $0x438] sm:$0xff]
      %v1913 = vld [vmem:[%s9 + $0x440] sm:$0xff]
      %v1914 = vld [vmem:[%s9 + $0x448] sm:$0xff]
      %v1915 = vld [vmem:[%s9 + $0x450] sm:$0xff]
      %v1916 = vld [vmem:[%s9 + $0x458] sm:$0xff]
      %v1917 = vld [vmem:[%s9 + $0x460] sm:$0xff]
      %v1918 = vld [vmem:[%s9 + $0x468] sm:$0xff]
      %v1919 = vld [vmem:[%s9 + $0x470] sm:$0xff]
      %v1920 = vld [vmem:[%s9 + $0x478] sm:$0xff]
      %v1921 = vld [vmem:[%s9 + $0x480] sm:$0xff]
      %v1922 = vld [vmem:[%s9 + $0x488] sm:$0xff]
      %v1923 = vld [vmem:[%s9 + $0x490] sm:$0xff]
      %v1924 = vld [vmem:[%s9 + $0x498] sm:$0xff]
      %v1925 = vld [vmem:[%s9 + $0x4a0] sm:$0xff]
      %v1926 = vld [vmem:[%s9 + $0x4a8] sm:$0xff]
      %v1927 = vld [vmem:[%s9 + $0x4b0] sm:$0xff]
      %v1928 = vld [vmem:[%s9 + $0x4b8] sm:$0xff]
      %v1929 = vld [vmem:[%s9 + $0x4c0] sm:$0xff]
      %v1930 = vld [vmem:[%s9 + $0x4c8] sm:$0xff]
      %v1931 = vld [vmem:[%s9 + $0x4d0] sm:$0xff]
      %v1932 = vld [vmem:[%s9 + $0x4d8] sm:$0xff]
      %v1933 = vld [vmem:[%s9 + $0x4e0] sm:$0xff]
      %v1934 = vld [vmem:[%s9 + $0x4e8] sm:$0xff]
      %v1935 = vld [vmem:[%s9 + $0x4f0] sm:$0xff]
      %v1936 = vld [vmem:[%s9 + $0x4f8] sm:$0xff]
      %v1937 = vld [vmem:[%s9 + $0x500] sm:$0xff]
      %v1938 = vld [vmem:[%s9 + $0x508] sm:$0xff]
      %v1939 = vld [vmem:[%s10] sm:$0x3]
      %v1941 = vlaneseq
      %v1942 = vshrl.u32 %v1941, 7
      %v1943 = vsub.s32 0, %v1942
      %v1944 = vrot.slane %v1939, %v1943
      %v1945 = vlaneseq
      %v1946 = vshrl.u32 %v1945, 7
      %v1947 = vsub.s32 1, %v1946
      %v1948 = vrot.slane %v1939, %v1947
      %v1952 = vsel %vm1338, %v1776, 0
      %1954 = vmatprep.subr.mxu0 %v1808
      %1955 = vmatpush1.msra.mxu0 %v1807
      %1956 = vmatprep.subr.mxu0 %v1806
      %1957 = vmatpush1.msra.mxu0 %v1805
      %1958 = vmatprep.subr.mxu0 %v1804
      %1959 = vmatpush1.msra.mxu0 %v1803
      %1960 = vmatprep.subr.mxu0 %v1802
      %1961 = vmatpush1.msra.mxu0 %v1801
      %1962 = vmatprep.subr.mxu0 %v1800
      %1963 = vmatpush1.msra.mxu0 %v1799
      %1964 = vmatprep.subr.mxu0 %v1798
      %1965 = vmatpush1.msra.mxu0 %v1797
      %1966 = vmatprep.subr.mxu0 %v1796
      %1967 = vmatpush1.msra.mxu0 %v1795
      %1968 = vmatprep.subr.mxu0 %v1794
      %1969 = vmatpush1.msra.mxu0 %v1793
      %1970 = vmatprep.subr.mxu0 %v1792
      %1971 = vmatpush1.msra.mxu0 %v1791
      %1972 = vmatprep.subr.mxu0 %v1790
      %1973 = vmatpush1.msra.mxu0 %v1789
      %1974 = vmatprep.subr.mxu0 %v1788
      %1975 = vmatpush1.msra.mxu0 %v1787
      %1976 = vmatprep.subr.mxu0 %v1786
      %1977 = vmatpush1.msra.mxu0 %v1785
      %1978 = vmatprep.subr.mxu0 %v1784
      %1979 = vmatpush1.msra.mxu0 %v1783
      %1980 = vmatprep.subr.mxu0 %v1782
      %1981 = vmatpush1.msra.mxu0 %v1781
      %1982 = vmatprep.subr.mxu0 %v1780
      %1983 = vmatpush1.msra.mxu0 %v1779
      %1984 = vmatprep.subr.mxu0 %v1778
      %1985 = vmatpush1.msra.mxu0 %v1777
      %1986 = vmatprep.subr.mxu0 %v1840
      %1987 = vmatpush2.msra.mxu0 %v1839
      %1988 = vmatprep.subr.mxu0 %v1838
      %1989 = vmatpush2.msra.mxu0 %v1837
      %1990 = vmatprep.subr.mxu0 %v1836
      %1991 = vmatpush2.msra.mxu0 %v1835
      %1992 = vmatprep.subr.mxu0 %v1834
      %1993 = vmatpush2.msra.mxu0 %v1833
      %1994 = vmatprep.subr.mxu0 %v1832
      %1995 = vmatpush2.msra.mxu0 %v1831
      %1996 = vmatprep.subr.mxu0 %v1830
      %1997 = vmatpush2.msra.mxu0 %v1829
      %1998 = vmatprep.subr.mxu0 %v1828
      %1999 = vmatpush2.msra.mxu0 %v1827
      %2000 = vmatprep.subr.mxu0 %v1826
      %2001 = vmatpush2.msra.mxu0 %v1825
      %2002 = vmatprep.subr.mxu0 %v1824
      %2003 = vmatpush2.msra.mxu0 %v1823
      %2004 = vmatprep.subr.mxu0 %v1822
      %2005 = vmatpush2.msra.mxu0 %v1821
      %2006 = vmatprep.subr.mxu0 %v1820
      %2007 = vmatpush2.msra.mxu0 %v1819
      %2008 = vmatprep.subr.mxu0 %v1818
      %2009 = vmatpush2.msra.mxu0 %v1817
      %2010 = vmatprep.subr.mxu0 %v1816
      %2011 = vmatpush2.msra.mxu0 %v1815
      %2012 = vmatprep.subr.mxu0 %v1814
      %2013 = vmatpush2.msra.mxu0 %v1813
      %2014 = vmatprep.subr.mxu0 %v1812
      %2015 = vmatpush2.msra.mxu0 %v1811
      %2016 = vmatprep.subr.mxu0 %v1810
      %2017 = vmatpush2.msra.mxu0 %v1809
      %2018 = vmatprep.mubr.f32.mxu0 %v1772
      %2019 = vmatmul.mubr.f32.gmra.mxu0 %v1771
      %v2020 = vpop.f32.mrf.mxu0
      %v2021 = vadd.f32 %v1944, %v2020
      %v2022 = vpop.f32.mrf.mxu0
      %v2023 = vadd.f32 %v1948, %v2022
      %2024 = vdwg.mxu0
      %2025 = vmatprep.subr.mxu0 %v1872
      %2026 = vmatpush1.msra.mxu0 %v1871
      %2027 = vmatprep.subr.mxu0 %v1870
      %2028 = vmatpush1.msra.mxu0 %v1869
      %2029 = vmatprep.subr.mxu0 %v1868
      %2030 = vmatpush1.msra.mxu0 %v1867
      %2031 = vmatprep.subr.mxu0 %v1866
      %2032 = vmatpush1.msra.mxu0 %v1865
      %2033 = vmatprep.subr.mxu0 %v1864
      %2034 = vmatpush1.msra.mxu0 %v1863
      %2035 = vmatprep.subr.mxu0 %v1862
      %2036 = vmatpush1.msra.mxu0 %v1861
      %2037 = vmatprep.subr.mxu0 %v1860
      %2038 = vmatpush1.msra.mxu0 %v1859
      %2039 = vmatprep.subr.mxu0 %v1858
      %2040 = vmatpush1.msra.mxu0 %v1857
      %2041 = vmatprep.subr.mxu0 %v1856
      %2042 = vmatpush1.msra.mxu0 %v1855
      %2043 = vmatprep.subr.mxu0 %v1854
      %2044 = vmatpush1.msra.mxu0 %v1853
      %2045 = vmatprep.subr.mxu0 %v1852
      %2046 = vmatpush1.msra.mxu0 %v1851
      %2047 = vmatprep.subr.mxu0 %v1850
      %2048 = vmatpush1.msra.mxu0 %v1849
      %2049 = vmatprep.subr.mxu0 %v1848
      %2050 = vmatpush1.msra.mxu0 %v1847
      %2051 = vmatprep.subr.mxu0 %v1846
      %2052 = vmatpush1.msra.mxu0 %v1845
      %2053 = vmatprep.subr.mxu0 %v1844
      %2054 = vmatpush1.msra.mxu0 %v1843
      %2055 = vmatprep.subr.mxu0 %v1842
      %2056 = vmatpush1.msra.mxu0 %v1841
      %2057 = vmatprep.subr.mxu0 %v1904
      %2058 = vmatpush2.msra.mxu0 %v1903
      %2059 = vmatprep.subr.mxu0 %v1902
      %2060 = vmatpush2.msra.mxu0 %v1901
      %2061 = vmatprep.subr.mxu0 %v1900
      %2062 = vmatpush2.msra.mxu0 %v1899
      %2063 = vmatprep.subr.mxu0 %v1898
      %2064 = vmatpush2.msra.mxu0 %v1897
      %2065 = vmatprep.subr.mxu0 %v1896
      %2066 = vmatpush2.msra.mxu0 %v1895
      %2067 = vmatprep.subr.mxu0 %v1894
      %2068 = vmatpush2.msra.mxu0 %v1893
      %2069 = vmatprep.subr.mxu0 %v1892
      %2070 = vmatpush2.msra.mxu0 %v1891
      %2071 = vmatprep.subr.mxu0 %v1890
      %2072 = vmatpush2.msra.mxu0 %v1889
      %2073 = vmatprep.subr.mxu0 %v1888
      %2074 = vmatpush2.msra.mxu0 %v1887
      %2075 = vmatprep.subr.mxu0 %v1886
      %2076 = vmatpush2.msra.mxu0 %v1885
      %2077 = vmatprep.subr.mxu0 %v1884
      %2078 = vmatpush2.msra.mxu0 %v1883
      %2079 = vmatprep.subr.mxu0 %v1882
      %2080 = vmatpush2.msra.mxu0 %v1881
      %2081 = vmatprep.subr.mxu0 %v1880
      %2082 = vmatpush2.msra.mxu0 %v1879
      %2083 = vmatprep.subr.mxu0 %v1878
      %2084 = vmatpush2.msra.mxu0 %v1877
      %2085 = vmatprep.subr.mxu0 %v1876
      %2086 = vmatpush2.msra.mxu0 %v1875
      %2087 = vmatprep.subr.mxu0 %v1874
      %2088 = vmatpush2.msra.mxu0 %v1873
      %2089 = vmatprep.mubr.f32.mxu0 %v1774
      %2090 = vmatmul.mubr.f32.gmra.mxu0 %v1773
      %v2091 = vpop.f32.mrf.mxu0
      %v2092 = vadd.f32 %v2021, %v2091
      %v2093 = vpop.f32.mrf.mxu0
      %v2094 = vadd.f32 %v2023, %v2093
      %2095 = vdwg.mxu0
      %2096 = vmatprep.subr.mxu0 %v1936
      %2097 = vmatpush1.msra.mxu0 %v1935
      %2098 = vmatprep.subr.mxu0 %v1934
      %2099 = vmatpush1.msra.mxu0 %v1933
      %2100 = vmatprep.subr.mxu0 %v1932
      %2101 = vmatpush1.msra.mxu0 %v1931
      %2102 = vmatprep.subr.mxu0 %v1930
      %2103 = vmatpush1.msra.mxu0 %v1929
      %2104 = vmatprep.subr.mxu0 %v1928
      %2105 = vmatpush1.msra.mxu0 %v1927
      %2106 = vmatprep.subr.mxu0 %v1926
      %2107 = vmatpush1.msra.mxu0 %v1925
      %2108 = vmatprep.subr.mxu0 %v1924
      %2109 = vmatpush1.msra.mxu0 %v1923
      %2110 = vmatprep.subr.mxu0 %v1922
      %2111 = vmatpush1.msra.mxu0 %v1921
      %2112 = vmatprep.subr.mxu0 %v1920
      %2113 = vmatpush1.msra.mxu0 %v1919
      %2114 = vmatprep.subr.mxu0 %v1918
      %2115 = vmatpush1.msra.mxu0 %v1917
      %2116 = vmatprep.subr.mxu0 %v1916
      %2117 = vmatpush1.msra.mxu0 %v1915
      %2118 = vmatprep.subr.mxu0 %v1914
      %2119 = vmatpush1.msra.mxu0 %v1913
      %2120 = vmatprep.subr.mxu0 %v1912
      %2121 = vmatpush1.msra.mxu0 %v1911
      %2122 = vmatprep.subr.mxu0 %v1910
      %2123 = vmatpush1.msra.mxu0 %v1909
      %2124 = vmatprep.subr.mxu0 %v1908
      %2125 = vmatpush1.msra.mxu0 %v1907
      %2126 = vmatprep.subr.mxu0 %v1906
      %2127 = vmatpush1.msra.mxu0 %v1905
      %2128 = vmatprep.subr.mxu0 0.0
      %2129 = vmatpush2.msra.mxu0 0.0
      %2130 = vmatprep.subr.mxu0 0.0
      %2131 = vmatpush2.msra.mxu0 0.0
      %2132 = vmatprep.subr.mxu0 0.0
      %2133 = vmatpush2.msra.mxu0 0.0
      %2134 = vmatprep.subr.mxu0 0.0
      %2135 = vmatpush2.msra.mxu0 0.0
      %2136 = vmatprep.subr.mxu0 0.0
      %2137 = vmatpush2.msra.mxu0 0.0
      %2138 = vmatprep.subr.mxu0 0.0
      %2139 = vmatpush2.msra.mxu0 0.0
      %2140 = vmatprep.subr.mxu0 0.0
      %2141 = vmatpush2.msra.mxu0 0.0
      %2142 = vmatprep.subr.mxu0 0.0
      %2143 = vmatpush2.msra.mxu0 0.0
      %2144 = vmatprep.subr.mxu0 0.0
      %2145 = vmatpush2.msra.mxu0 0.0
      %2146 = vmatprep.subr.mxu0 0.0
      %2147 = vmatpush2.msra.mxu0 0.0
      %2148 = vmatprep.subr.mxu0 0.0
      %2149 = vmatpush2.msra.mxu0 0.0
      %2150 = vmatprep.subr.mxu0 0.0
      %2151 = vmatpush2.msra.mxu0 0.0
      %2152 = vmatprep.subr.mxu0 0.0
      %2153 = vmatpush2.msra.mxu0 0.0
      %2154 = vmatprep.subr.mxu0 0.0
      %2155 = vmatpush2.msra.mxu0 0.0
      %2156 = vmatprep.subr.mxu0 0.0
      %2157 = vmatpush2.msra.mxu0 0.0
      %2158 = vmatprep.subr.mxu0 %v1938
      %2159 = vmatpush2.msra.mxu0 %v1937
      %2160 = vmatprep.mubr.f32.mxu0 %v1952
      %2161 = vmatmul.mubr.f32.gmra.mxu0 %v1775
      %v2162 = vpop.f32.mrf.mxu0
      %v2163 = vadd.f32 %v2092, %v2162
      %v2164 = vpop.f32.mrf.mxu0
      %v2165 = vadd.f32 %v2094, %v2164
      %2166 = vdwg.mxu0
      %v2167 = vtanh.pop %v2163
      %v2168 = vtanh.pop %v2165
      %v2171 = vcombine.low %v2167, %v2168
      %v2173 = vunpack.c.l.s4 1966171168
      %v2174 = vunpack.c.0.s8 %v2173
      %v2175 = vlaneseq
      %v2176 = vshrl.u32 %v2175, 7
      %v2177 = vsub.s32 %v2174, %v2176
      %v2178 = vrot.slane %v2171, %v2177
      %v2180 = vunpack.c.l.s4 1966171168
      %v2181 = vunpack.c.0.s8 %v2180
      %v2182 = vlaneseq
      %v2183 = vshrl.u32 %v2182, 7
      %v2184 = vsub.s32 %v2181, %v2183
      %v2185 = vrot.slane %v2178, %v2184
      %v2187 = vlaneseq
      %vm2188 = vcmp.ge.s32.totalorder %v2187, 0
      %vm2189 = vcmp.lt.s32.totalorder %v2187, 256
      %vm2190 = vmand %vm2188, %vm2189
      %2191 = vst.msk [vmem:[%s381] sm:$0x3] %vm2190, %v2185
      %p2192 = scmp.lt.s32.totalorder %s22, 1
      %s2193 = scalar_select %p2192, %s22, 1
      %s2194 = smul.addr %s2193, 2
      %s2195 = scalar_lea.vmem %s11, %s2194
      // Predicated region
      $region65: #{autoencoder_forward.1} parent=63 // pred_check
        %p2196 = pneg %p276
      $region66: #{autoencoder_forward.1} parent=63 // pred_check_branch
        %2198 = sbr.rel (%p2196) target = $region68
      $region67: #{autoencoder_forward.1} parent=63 // pred_region
        _
      $region68: #{autoencoder_forward.1} parent=63 // pred_fallthru
        _
    $region64: #{autoencoder_forward.1} parent=5 // pred_fallthru
      _
    %p2199 = scmp.le.s32.totalorder 2, %s17
    // Predicated region
    $region69: #{autoencoder_forward.1} parent=5 // pred_check
      %p2200 = pneg %p2199
    $region70: #{autoencoder_forward.1} parent=5 // pred_check_branch
      %2202 = sbr.rel (%p2200) target = $region72
    $region71: #{autoencoder_forward.1} parent=5 // pred_region
      %s2203 = ssub.s32 %s17, 2
      // Predicated region
      $region73: #{autoencoder_forward.1} parent=71 // pred_check
        %p2204 = pneg %p282
      $region74: #{autoencoder_forward.1} parent=71 // pred_check_branch
        %2206 = sbr.rel (%p2204) target = $region76
      $region75: #{autoencoder_forward.1} parent=71 // pred_region
        %p2207 = scmp.lt.s32.totalorder %s23, 1
        %s2208 = scalar_select %p2207, %s23, 1
        %s2209 = smul.addr %s2208, 2
        %s2210 = scalar_lea.vmem %s11, %s2209
      $region76: #{autoencoder_forward.1} parent=71 // pred_fallthru
        _
    $region72: #{autoencoder_forward.1} parent=5 // pred_fallthru
      _
  $region6: #{autoencoder_forward.1} parent=0 // loop_footer
    %s21 = sadd.s32 1, %s17
  $region7: #{autoencoder_forward.1} parent=0 // loop_footer_branch
    %16 = sbr.rel target = $region3
  $region8: #{autoencoder_forward.1} parent=0 // loop_exit
    _

</llo_original>
